<compile_context>
chip_gen: v5e
topology: v5e:2x2
jax: 0.10.0
libtpu: 0.0.40
codegen_flags: <defaults>
</compile_context>

<pallas_src>
import functools
import math

import jax
import jax.numpy as jnp
from jax.experimental import pallas as pl
from jax.experimental.pallas import tpu as pltpu

_BF16 = jnp.bfloat16


def _layernorm(x, g, b, eps=1e-5):
    mu = jnp.mean(x, axis=-1, keepdims=True)
    var = jnp.mean((x - mu) ** 2, axis=-1, keepdims=True)
    return (x - mu) * jax.lax.rsqrt(var + eps) * g + b


def _mxu(a, b):
    # MXU matmul: bf16 operands, f32 accumulate.
    return jnp.dot(a.astype(_BF16), b.astype(_BF16),
                   preferred_element_type=jnp.float32)


def _mxu_bmm(eq, a, b):
    # Batched (per-frame) MXU matmul: bf16 operands, f32 accumulate.
    return jnp.einsum(eq, a.astype(_BF16), b.astype(_BF16),
                      preferred_element_type=jnp.float32)


# -----------------------------------------------------------------------------
# Fused kernel: patch-embed + pos add + cls-token prepend + post-LN encoder
# layer (single head) + cls head (LayerNorm + Linear padded to 128 lanes).
# One grid step processes a block of `fb` frames.
# -----------------------------------------------------------------------------
def _vistr_fused_kernel(patch_ref, pos_ref, cls_ref, w_pe_ref, b_pe_ref,
                        wqkv_ref, bqkv_ref, wo_ref, bo_ref, ln1g_ref, ln1b_ref,
                        w1_ref, b1_ref, w2_ref, b2_ref, ln2g_ref, ln2b_ref,
                        lnhg_ref, lnhb_ref, whp_ref, bhp_ref,
                        out_ref, tok_ref, *, hw):
    FB, Np, em = tok_ref.shape                    # Np is a multiple of 8

    # --- patch-embed "conv" (stacked matmul over fb*hw rows) + pos add ---
    src = _mxu(patch_ref[...], w_pe_ref[...]) + b_pe_ref[...]   # (FB*hw, em) f32
    src = src + pos_ref[...].astype(jnp.float32)

    # --- sublane-aligned token assembly in VMEM scratch:
    #     rows 0..hw-1 = patches (offset-0 aligned store),
    #     row hw       = cls token,
    #     rows hw+1..  = zero padding (masked out of the attention below) ---
    tok_ref[:, 0:hw, :] = src.reshape(FB, hw, em)
    tok_ref[:, hw:hw + 1, :] = jnp.broadcast_to(
        cls_ref[...].reshape(1, 1, em), (FB, 1, em))
    if Np > hw + 1:
        tok_ref[:, hw + 1:, :] = jnp.zeros((FB, Np - hw - 1, em), jnp.float32)

    x = tok_ref[...].reshape(FB * Np, em)         # layout-free (Np % 8 == 0)

    # --- self attention (single head, fused QKV, 1/sqrt(d) folded into wq) ---
    qkv = _mxu(x, wqkv_ref[...]) + bqkv_ref[...]                 # (FB*Np, 3*em)
    q = qkv[:, 0:em].reshape(FB, Np, em)
    k = qkv[:, em:2 * em].reshape(FB, Np, em)
    v = qkv[:, 2 * em:3 * em].reshape(FB, Np, em)

    s = _mxu_bmm('bqd,bkd->bqk', q, k)                           # (FB, Np, Np)
    if Np > hw + 1:
        key_id = jax.lax.broadcasted_iota(jnp.int32, (1, 1, Np), 2)
        s = jnp.where(key_id <= hw, s, -1e30)                    # mask pad keys
    s = s - jnp.max(s, axis=-1, keepdims=True)
    p = jnp.exp(s)
    p = p * pl.reciprocal(jnp.sum(p, axis=-1, keepdims=True), approx=True)
    attn = _mxu_bmm('bqk,bkd->bqd', p, v).reshape(FB * Np, em)

    # post-LN residual (PyTorch TransformerEncoderLayer default order)
    x = _layernorm(x + _mxu(attn, wo_ref[...]) + bo_ref[...],
                   ln1g_ref[...], ln1b_ref[...])

    # --- feed-forward + post-LN ---
    h = jnp.maximum(_mxu(x, w1_ref[...]) + b1_ref[...], 0.0)
    x = _layernorm(x + _mxu(h, w2_ref[...]) + b2_ref[...],
                   ln2g_ref[...], ln2b_ref[...])

    # --- mlp_head on the cls token (row hw): LayerNorm -> Linear(em, 1),
    #     padded to 128 output lanes so the store is lane-dense ---
    cls_tok = x.reshape(FB, Np, em)[:, hw, :]                    # (FB, em)
    cls_n = _layernorm(cls_tok, lnhg_ref[...], lnhb_ref[...])
    out_ref[...] = _mxu(cls_n, whp_ref[...]) + bhp_ref[...]      # (FB, 128)


def _full_spec(a):
    nd = a.ndim
    return pl.BlockSpec(a.shape, lambda i, _nd=nd: (0,) * _nd)


def _pick_frame_block(f, max_fb=8):
    """Largest multiple-of-8 frame block dividing f with >= 2 grid steps.

    Falls back to the whole frame axis (single grid step) if f is too small
    to tile while keeping the output block sublane-aligned.
    """
    fb = (max_fb // 8) * 8
    while fb >= 8:
        if f % fb == 0 and f // fb >= 2:
            return fb
        fb -= 8
    return f


# -----------------------------------------------------------------------------
# Full VisTRcls forward (thin glue + one fused, frame-tiled kernel).
# -----------------------------------------------------------------------------
def vistr_cls_forward(samples, params, *, max_fb=8):
    f, c, H, W = samples.shape
    patch = params["patch"]
    em = params["b_pe"].shape[1]
    h, w = H // patch, W // patch
    hw = h * w
    pd = c * patch * patch
    Np = ((hw + 1) + 7) // 8 * 8           # padded sequence length

    # Non-overlapping patchify; the bf16 cast is fused into the same XLA op so
    # the transpose and the kernel DMA move half the bytes.
    # TODO(synk): read raw (f, c, H, W) tiles directly in the kernel via
    #             BlockSpec DMA and regroup there to skip this extra HBM pass.
    patches = samples.astype(_BF16).reshape(f, c, h, patch, w, patch)
    patches = patches.transpose(0, 2, 4, 1, 3, 5).reshape(f * hw, pd)

    fb = _pick_frame_block(f, max_fb)
    nblk = f // fb

    weight_args = (
        params["cls_token"], params["w_pe"], params["b_pe"],
        params["wqkv"], params["bqkv"], params["wo"], params["bo"],
        params["ln1g"], params["ln1b"],
        params["w1"], params["b1"], params["w2"], params["b2"],
        params["ln2g"], params["ln2b"],
        params["lnhg"], params["lnhb"],
        params["wh_pad"], params["bh_pad"],
    )

    in_specs = [
        pl.BlockSpec((fb * hw, pd), lambda i: (i, 0)),   # patches (bf16)
        pl.BlockSpec((fb * hw, em), lambda i: (i, 0)),   # pos     (bf16)
    ] + [_full_spec(a) for a in weight_args]
    # TODO(synk): single-buffer the constant weight blocks (pl.Buffered(1))
    #             once per-generation VMEM headroom on v7x demands it.

    out = pl.pallas_call(
        functools.partial(_vistr_fused_kernel, hw=hw),
        out_shape=jax.ShapeDtypeStruct((f, 128), jnp.float32),
        grid=(nblk,),
        in_specs=in_specs,
        out_specs=pl.BlockSpec((fb, 128), lambda i: (i, 0)),
        scratch_shapes=[pltpu.VMEM((fb, Np, em), jnp.float32)],
        compiler_params=pltpu.CompilerParams(
            dimension_semantics=("parallel",),
            # Safe on all generations (v7x physical VMEM is 64 MiB); raise
            # towards 96 MiB on v5e/v6e and re-derive fb for v7x at real sizes.
            vmem_limit_bytes=48 * 1024 * 1024,
        ),
    )(patches, params["pos"], *weight_args)

    return out[:, :1]                      # (f, 1); lanes 1..127 are padding


# -----------------------------------------------------------------------------
def build_params(key, *, f, em, patch, h, w, dff):
    pd = 3 * patch * patch
    hw = h * w
    ks = jax.random.split(key, 12)

    def n(k, shape, scale=0.02):
        return (scale * jax.random.normal(k, shape)).astype(jnp.float32)

    # Positional volume [1, f, em, h, w]; reshuffled ONCE here to [f*hw, em]
    # (flatten(-2) -> permute(0,1,3,2) -> identity trilinear -> squeeze),
    # stored bf16 so the per-step DMA moves half the bytes.
    pos5 = n(ks[0], (1, f, em, h, w))
    pos = pos5.reshape(1, f, em, hw).transpose(0, 1, 3, 2).reshape(f * hw, em)

    # Fused QKV projection, with the 1/sqrt(d) attention scale folded into wq.
    scale = 1.0 / math.sqrt(em)
    wq, wk, wv = n(ks[2], (em, em)), n(ks[3], (em, em)), n(ks[4], (em, em))
    wqkv = jnp.concatenate([wq * scale, wk, wv], axis=1)       # (em, 3*em)
    bqkv = jnp.zeros((1, 3 * em), jnp.float32)

    # Head Linear(em, 1) padded to 128 output lanes (lane-dense store).
    wh = n(ks[8], (em, 1))
    wh_pad = jnp.zeros((em, 128), jnp.float32).at[:, :1].set(wh)

    return {
        "patch": patch,
        "cls_token": jnp.zeros((1, em), jnp.float32),          # torch.zeros init
        "pos": pos.astype(_BF16),
        "w_pe": n(ks[1], (pd, em)).astype(_BF16),
        "b_pe": jnp.zeros((1, em), jnp.float32),
        "wqkv": wqkv.astype(_BF16),
        "bqkv": bqkv,
        "wo": n(ks[5], (em, em)).astype(_BF16),
        "bo": jnp.zeros((1, em), jnp.float32),
        "ln1g": jnp.ones((1, em), jnp.float32),
        "ln1b": jnp.zeros((1, em), jnp.float32),
        "w1": n(ks[6], (em, dff)).astype(_BF16),
        "b1": jnp.zeros((1, dff), jnp.float32),
        "w2": n(ks[7], (dff, em)).astype(_BF16),
        "b2": jnp.zeros((1, em), jnp.float32),
        "ln2g": jnp.ones((1, em), jnp.float32),
        "ln2b": jnp.zeros((1, em), jnp.float32),
        "lnhg": jnp.ones((1, em), jnp.float32),
        "lnhb": jnp.zeros((1, em), jnp.float32),
        "wh_pad": wh_pad.astype(_BF16),
        "bh_pad": jnp.zeros((1, 128), jnp.float32),
    }


if __name__ == "__main__":
    key = jax.random.PRNGKey(0)
    k_in, k_par = jax.random.split(key)

    # 16 frames, 3 channels, 16x16 images, patch 8 -> h=w=2 (hw=4, Np=8),
    # embed 32, ffn 64.  f=16 gives fb=8 / nblk=2 so the grid pipelines and
    # can shard across two v7x TensorCores.  (Real model sizes should pick
    # em/dff as multiples of 128 for full lane/MXU occupancy.)
    f, H, W, patch, em, dff = 16, 16, 16, 8, 32, 64
    samples = jax.random.normal(k_in, (f, 3, H, W), dtype=jnp.float32)

    params = build_params(k_par, f=f, em=em, patch=patch,
                          h=H // patch, w=W // patch, dff=dff)

    logits = vistr_cls_forward(samples, params)
    logits = jax.block_until_ready(logits)

    assert logits.shape == (f, 1), logits.shape
    assert bool(jnp.all(jnp.isfinite(logits)))
    print("KERNEL_OK")
</pallas_src>

<mosaic_0001>
module attributes {stable_mosaic.version = 11 : i64} {
  func.func @_vistr_fused_kernel(%arg0: i32, %arg1: memref<32x192xbf16, #tpu.memory_space<vmem>>, %arg2: memref<32x32xbf16, #tpu.memory_space<vmem>>, %arg3: memref<1x32xf32, #tpu.memory_space<vmem>>, %arg4: memref<192x32xbf16, #tpu.memory_space<vmem>>, %arg5: memref<1x32xf32, #tpu.memory_space<vmem>>, %arg6: memref<32x96xbf16, #tpu.memory_space<vmem>>, %arg7: memref<1x96xf32, #tpu.memory_space<vmem>>, %arg8: memref<32x32xbf16, #tpu.memory_space<vmem>>, %arg9: memref<1x32xf32, #tpu.memory_space<vmem>>, %arg10: memref<1x32xf32, #tpu.memory_space<vmem>>, %arg11: memref<1x32xf32, #tpu.memory_space<vmem>>, %arg12: memref<32x64xbf16, #tpu.memory_space<vmem>>, %arg13: memref<1x64xf32, #tpu.memory_space<vmem>>, %arg14: memref<64x32xbf16, #tpu.memory_space<vmem>>, %arg15: memref<1x32xf32, #tpu.memory_space<vmem>>, %arg16: memref<1x32xf32, #tpu.memory_space<vmem>>, %arg17: memref<1x32xf32, #tpu.memory_space<vmem>>, %arg18: memref<1x32xf32, #tpu.memory_space<vmem>>, %arg19: memref<1x32xf32, #tpu.memory_space<vmem>>, %arg20: memref<32x128xbf16, #tpu.memory_space<vmem>>, %arg21: memref<1x128xf32, #tpu.memory_space<vmem>>, %arg22: memref<8x128xf32, #tpu.memory_space<vmem>>, %arg23: memref<8x8x32xf32, #tpu.memory_space<vmem>>) attributes {dimension_semantics = [#tpu.dimension_semantics<parallel>], iteration_bounds = array<i64: 2>, scalar_prefetch = 0 : i64, scratch_operands = 1 : i64, tpu.core_type = #tpu.core_type<tc>, window_params = [{transform_indices = @transform_0, window_bounds = array<i64: 32, 192>}, {transform_indices = @transform_1, window_bounds = array<i64: 32, 32>}, {pipeline_mode = #tpu.pipeline_mode<synchronous>, transform_indices = @transform_2, window_bounds = array<i64: 1, 32>}, {pipeline_mode = #tpu.pipeline_mode<synchronous>, transform_indices = @transform_3, window_bounds = array<i64: 192, 32>}, {pipeline_mode = #tpu.pipeline_mode<synchronous>, transform_indices = @transform_4, window_bounds = array<i64: 1, 32>}, {pipeline_mode = #tpu.pipeline_mode<synchronous>, transform_indices = @transform_5, window_bounds = array<i64: 32, 96>}, {pipeline_mode = #tpu.pipeline_mode<synchronous>, transform_indices = @transform_6, window_bounds = array<i64: 1, 96>}, {pipeline_mode = #tpu.pipeline_mode<synchronous>, transform_indices = @transform_7, window_bounds = array<i64: 32, 32>}, {pipeline_mode = #tpu.pipeline_mode<synchronous>, transform_indices = @transform_8, window_bounds = array<i64: 1, 32>}, {pipeline_mode = #tpu.pipeline_mode<synchronous>, transform_indices = @transform_9, window_bounds = array<i64: 1, 32>}, {pipeline_mode = #tpu.pipeline_mode<synchronous>, transform_indices = @transform_10, window_bounds = array<i64: 1, 32>}, {pipeline_mode = #tpu.pipeline_mode<synchronous>, transform_indices = @transform_11, window_bounds = array<i64: 32, 64>}, {pipeline_mode = #tpu.pipeline_mode<synchronous>, transform_indices = @transform_12, window_bounds = array<i64: 1, 64>}, {pipeline_mode = #tpu.pipeline_mode<synchronous>, transform_indices = @transform_13, window_bounds = array<i64: 64, 32>}, {pipeline_mode = #tpu.pipeline_mode<synchronous>, transform_indices = @transform_14, window_bounds = array<i64: 1, 32>}, {pipeline_mode = #tpu.pipeline_mode<synchronous>, transform_indices = @transform_15, window_bounds = array<i64: 1, 32>}, {pipeline_mode = #tpu.pipeline_mode<synchronous>, transform_indices = @transform_16, window_bounds = array<i64: 1, 32>}, {pipeline_mode = #tpu.pipeline_mode<synchronous>, transform_indices = @transform_17, window_bounds = array<i64: 1, 32>}, {pipeline_mode = #tpu.pipeline_mode<synchronous>, transform_indices = @transform_18, window_bounds = array<i64: 1, 32>}, {pipeline_mode = #tpu.pipeline_mode<synchronous>, transform_indices = @transform_19, window_bounds = array<i64: 32, 128>}, {pipeline_mode = #tpu.pipeline_mode<synchronous>, transform_indices = @transform_20, window_bounds = array<i64: 1, 128>}, {transform_indices = @transform_21, window_bounds = array<i64: 8, 128>}]} {
    %c0 = arith.constant 0 : index
    %c0_0 = arith.constant 0 : index
    %0 = vector.load %arg1[%c0, %c0_0] : memref<32x192xbf16, #tpu.memory_space<vmem>>, vector<32x192xbf16>
    %c0_1 = arith.constant 0 : index
    %c0_2 = arith.constant 0 : index
    %1 = vector.load %arg4[%c0_1, %c0_2] : memref<192x32xbf16, #tpu.memory_space<vmem>>, vector<192x32xbf16>
    %cst = arith.constant dense<0.000000e+00> : vector<32x32xf32>
    %2 = tpu.matmul %0, %1, %cst {dimension_numbers = #tpu.dot_dimension_numbers<[1], [0], [0], [1], [0, 0, 1, 1], [], []>} : vector<32x192xbf16>, vector<192x32xbf16>, vector<32x32xf32> -> vector<32x32xf32>
    %c0_3 = arith.constant 0 : index
    %c0_4 = arith.constant 0 : index
    %3 = vector.load %arg5[%c0_3, %c0_4] : memref<1x32xf32, #tpu.memory_space<vmem>>, vector<1x32xf32>
    %4 = vector.broadcast %3 : vector<1x32xf32> to vector<32x32xf32>
    %5 = arith.addf %2, %4 : vector<32x32xf32>
    %c0_5 = arith.constant 0 : index
    %c0_6 = arith.constant 0 : index
    %6 = vector.load %arg2[%c0_5, %c0_6] : memref<32x32xbf16, #tpu.memory_space<vmem>>, vector<32x32xbf16>
    %7 = arith.extf %6 : vector<32x32xbf16> to vector<32x32xf32>
    %8 = arith.addf %5, %7 : vector<32x32xf32>
    %9 = vector.shape_cast %8 : vector<32x32xf32> to vector<8x4x32xf32>
    %c0_7 = arith.constant 0 : index
    %c0_8 = arith.constant 0 : index
    %c0_9 = arith.constant 0 : index
    %10 = vector.load %arg23[%c0_7, %c0_8, %c0_9] : memref<8x8x32xf32, #tpu.memory_space<vmem>>, vector<8x4x32xf32>
    tpu.vector_store %arg23[%c0_7, %c0_8, %c0_9], %9 {strides = array<i32>} : memref<8x8x32xf32, #tpu.memory_space<vmem>>, vector<8x4x32xf32>,
    %c0_10 = arith.constant 0 : index
    %c0_11 = arith.constant 0 : index
    %11 = vector.load %arg3[%c0_10, %c0_11] : memref<1x32xf32, #tpu.memory_space<vmem>>, vector<1x32xf32>
    %12 = vector.shape_cast %11 : vector<1x32xf32> to vector<1x1x32xf32>
    %13 = vector.shape_cast %12 : vector<1x1x32xf32> to vector<1x1x32xf32>
    %14 = vector.broadcast %13 : vector<1x1x32xf32> to vector<8x1x32xf32>
    %c0_12 = arith.constant 0 : index
    %c4 = arith.constant 4 : index
    %c0_13 = arith.constant 0 : index
    %15 = vector.load %arg23[%c0_12, %c4, %c0_13] : memref<8x8x32xf32, #tpu.memory_space<vmem>>, vector<8x1x32xf32>
    tpu.vector_store %arg23[%c0_12, %c4, %c0_13], %14 {strides = array<i32>} : memref<8x8x32xf32, #tpu.memory_space<vmem>>, vector<8x1x32xf32>,
    %cst_14 = arith.constant 0.000000e+00 : f32
    %16 = vector.broadcast %cst_14 : f32 to vector<8x3x32xf32>
    %c0_15 = arith.constant 0 : index
    %c5 = arith.constant 5 : index
    %c0_16 = arith.constant 0 : index
    %17 = vector.load %arg23[%c0_15, %c5, %c0_16] : memref<8x8x32xf32, #tpu.memory_space<vmem>>, vector<8x3x32xf32>
    tpu.vector_store %arg23[%c0_15, %c5, %c0_16], %16 {strides = array<i32>} : memref<8x8x32xf32, #tpu.memory_space<vmem>>, vector<8x3x32xf32>,
    %c0_17 = arith.constant 0 : index
    %c0_18 = arith.constant 0 : index
    %c0_19 = arith.constant 0 : index
    %18 = vector.load %arg23[%c0_17, %c0_18, %c0_19] : memref<8x8x32xf32, #tpu.memory_space<vmem>>, vector<8x8x32xf32>
    %19 = vector.shape_cast %18 : vector<8x8x32xf32> to vector<64x32xf32>
    %c0_20 = arith.constant 0 : index
    %c0_21 = arith.constant 0 : index
    %20 = vector.load %arg6[%c0_20, %c0_21] : memref<32x96xbf16, #tpu.memory_space<vmem>>, vector<32x96xbf16>
    %21 = arith.truncf %19 : vector<64x32xf32> to vector<64x32xbf16>
    %cst_22 = arith.constant dense<0.000000e+00> : vector<64x96xf32>
    %22 = tpu.matmul %21, %20, %cst_22 {dimension_numbers = #tpu.dot_dimension_numbers<[1], [0], [0], [1], [0, 0, 1, 1], [], []>} : vector<64x32xbf16>, vector<32x96xbf16>, vector<64x96xf32> -> vector<64x96xf32>
    %c0_23 = arith.constant 0 : index
    %c0_24 = arith.constant 0 : index
    %23 = vector.load %arg7[%c0_23, %c0_24] : memref<1x96xf32, #tpu.memory_space<vmem>>, vector<1x96xf32>
    %24 = vector.broadcast %23 : vector<1x96xf32> to vector<64x96xf32>
    %25 = arith.addf %22, %24 : vector<64x96xf32>
    %26 = vector.extract_strided_slice %25 {offsets = [0, 0], sizes = [64, 32], strides = [1, 1]} : vector<64x96xf32> to vector<64x32xf32>
    %27 = vector.shape_cast %26 : vector<64x32xf32> to vector<8x8x32xf32>
    %28 = vector.extract_strided_slice %25 {offsets = [0, 32], sizes = [64, 32], strides = [1, 1]} : vector<64x96xf32> to vector<64x32xf32>
    %29 = vector.shape_cast %28 : vector<64x32xf32> to vector<8x8x32xf32>
    %30 = vector.extract_strided_slice %25 {offsets = [0, 64], sizes = [64, 32], strides = [1, 1]} : vector<64x96xf32> to vector<64x32xf32>
    %31 = vector.shape_cast %30 : vector<64x32xf32> to vector<8x8x32xf32>
    %32 = arith.truncf %27 : vector<8x8x32xf32> to vector<8x8x32xbf16>
    %33 = arith.truncf %29 : vector<8x8x32xf32> to vector<8x8x32xbf16>
    "tpu.trace_start"() <{level = 10 : i32, message = "bqd,bkd->bqk"}> : () -> ()
    %cst_25 = arith.constant dense<0.000000e+00> : vector<8x8x8xf32>
    %34 = tpu.matmul %32, %33, %cst_25 {dimension_numbers = #tpu.dot_dimension_numbers<[2], [2], [1], [1], [0, 0, 0, 1, 1, 1], [0], [0]>} : vector<8x8x32xbf16>, vector<8x8x32xbf16>, vector<8x8x8xf32> -> vector<8x8x8xf32>
    "tpu.trace_stop"() : () -> ()
    %35 = tpu.iota {dimensions = array<i32: 2>} : vector<1x1x8xi32>
    %c4_i32 = arith.constant 4 : i32
    %36 = vector.broadcast %c4_i32 : i32 to vector<1x1x8xi32>
    %37 = arith.cmpi sle, %35, %36 : vector<1x1x8xi32>
    %cst_26 = arith.constant -1.000000e+30 : f32
    %38 = vector.shape_cast %37 : vector<1x1x8xi1> to vector<1x1x8xi1>
    %39 = vector.broadcast %38 : vector<1x1x8xi1> to vector<8x8x8xi1>
    %40 = vector.broadcast %cst_26 : f32 to vector<8x8x8xf32>
    %41 = arith.select %39, %34, %40 : vector<8x8x8xi1>, vector<8x8x8xf32>
    %cst_27 = arith.constant dense<0xFF800000> : vector<8x8xf32>
    %42 = vector.multi_reduction <maximumf>, %41, %cst_27 [2] : vector<8x8x8xf32> to vector<8x8xf32>
    %43 = vector.shape_cast %42 : vector<8x8xf32> to vector<8x8x1xf32>
    %44 = vector.broadcast %43 : vector<8x8x1xf32> to vector<8x8x8xf32>
    %45 = arith.subf %41, %44 : vector<8x8x8xf32>
    %46 = math.exp %45 : vector<8x8x8xf32>
    %cst_28 = arith.constant dense<0.000000e+00> : vector<8x8xf32>
    %47 = vector.multi_reduction <add>, %46, %cst_28 [2] : vector<8x8x8xf32> to vector<8x8xf32>
    %48 = vector.shape_cast %47 : vector<8x8xf32> to vector<8x8x1xf32>
    %49 = tpu.reciprocal %48 {approx = true} : vector<8x8x1xf32> -> vector<8x8x1xf32>
    %50 = vector.broadcast %49 : vector<8x8x1xf32> to vector<8x8x8xf32>
    %51 = arith.mulf %46, %50 : vector<8x8x8xf32>
    %52 = arith.truncf %51 : vector<8x8x8xf32> to vector<8x8x8xbf16>
    %53 = arith.truncf %31 : vector<8x8x32xf32> to vector<8x8x32xbf16>
    "tpu.trace_start"() <{level = 10 : i32, message = "bqk,bkd->bqd"}> : () -> ()
    %cst_29 = arith.constant dense<0.000000e+00> : vector<8x8x32xf32>
    %54 = tpu.matmul %52, %53, %cst_29 {dimension_numbers = #tpu.dot_dimension_numbers<[2], [1], [1], [2], [0, 0, 0, 1, 1, 2], [0], [0]>} : vector<8x8x8xbf16>, vector<8x8x32xbf16>, vector<8x8x32xf32> -> vector<8x8x32xf32>
    "tpu.trace_stop"() : () -> ()
    %55 = vector.shape_cast %54 : vector<8x8x32xf32> to vector<64x32xf32>
    %c0_30 = arith.constant 0 : index
    %c0_31 = arith.constant 0 : index
    %56 = vector.load %arg8[%c0_30, %c0_31] : memref<32x32xbf16, #tpu.memory_space<vmem>>, vector<32x32xbf16>
    %57 = arith.truncf %55 : vector<64x32xf32> to vector<64x32xbf16>
    %cst_32 = arith.constant dense<0.000000e+00> : vector<64x32xf32>
    %58 = tpu.matmul %57, %56, %cst_32 {dimension_numbers = #tpu.dot_dimension_numbers<[1], [0], [0], [1], [0, 0, 1, 1], [], []>} : vector<64x32xbf16>, vector<32x32xbf16>, vector<64x32xf32> -> vector<64x32xf32>
    %59 = arith.addf %19, %58 : vector<64x32xf32>
    %c0_33 = arith.constant 0 : index
    %c0_34 = arith.constant 0 : index
    %60 = vector.load %arg9[%c0_33, %c0_34] : memref<1x32xf32, #tpu.memory_space<vmem>>, vector<1x32xf32>
    %61 = vector.broadcast %60 : vector<1x32xf32> to vector<64x32xf32>
    %62 = arith.addf %59, %61 : vector<64x32xf32>
    %c0_35 = arith.constant 0 : index
    %c0_36 = arith.constant 0 : index
    %63 = vector.load %arg10[%c0_35, %c0_36] : memref<1x32xf32, #tpu.memory_space<vmem>>, vector<1x32xf32>
    %c0_37 = arith.constant 0 : index
    %c0_38 = arith.constant 0 : index
    %64 = vector.load %arg11[%c0_37, %c0_38] : memref<1x32xf32, #tpu.memory_space<vmem>>, vector<1x32xf32>
    %cst_39 = arith.constant dense<0.000000e+00> : vector<64xf32>
    %65 = vector.multi_reduction <add>, %62, %cst_39 [1] : vector<64x32xf32> to vector<64xf32>
    %66 = vector.shape_cast %65 : vector<64xf32> to vector<64x1xf32>
    %cst_40 = arith.constant 3.200000e+01 : f32
    %67 = vector.broadcast %cst_40 : f32 to vector<64x1xf32>
    %68 = arith.divf %66, %67 : vector<64x1xf32>
    %69 = vector.broadcast %68 : vector<64x1xf32> to vector<64x32xf32>
    %70 = arith.subf %62, %69 : vector<64x32xf32>
    %71 = arith.mulf %70, %70 : vector<64x32xf32>
    %cst_41 = arith.constant dense<0.000000e+00> : vector<64xf32>
    %72 = vector.multi_reduction <add>, %71, %cst_41 [1] : vector<64x32xf32> to vector<64xf32>
    %73 = vector.shape_cast %72 : vector<64xf32> to vector<64x1xf32>
    %cst_42 = arith.constant 3.200000e+01 : f32
    %74 = vector.broadcast %cst_42 : f32 to vector<64x1xf32>
    %75 = arith.divf %73, %74 : vector<64x1xf32>
    %76 = vector.broadcast %68 : vector<64x1xf32> to vector<64x32xf32>
    %77 = arith.subf %62, %76 : vector<64x32xf32>
    %cst_43 = arith.constant 9.99999974E-6 : f32
    %78 = vector.broadcast %cst_43 : f32 to vector<64x1xf32>
    %79 = arith.addf %75, %78 : vector<64x1xf32>
    %80 = math.rsqrt %79 : vector<64x1xf32>
    %81 = vector.broadcast %80 : vector<64x1xf32> to vector<64x32xf32>
    %82 = arith.mulf %77, %81 : vector<64x32xf32>
    %83 = vector.broadcast %63 : vector<1x32xf32> to vector<64x32xf32>
    %84 = arith.mulf %82, %83 : vector<64x32xf32>
    %85 = vector.broadcast %64 : vector<1x32xf32> to vector<64x32xf32>
    %86 = arith.addf %84, %85 : vector<64x32xf32>
    %c0_44 = arith.constant 0 : index
    %c0_45 = arith.constant 0 : index
    %87 = vector.load %arg12[%c0_44, %c0_45] : memref<32x64xbf16, #tpu.memory_space<vmem>>, vector<32x64xbf16>
    %88 = arith.truncf %86 : vector<64x32xf32> to vector<64x32xbf16>
    %cst_46 = arith.constant dense<0.000000e+00> : vector<64x64xf32>
    %89 = tpu.matmul %88, %87, %cst_46 {dimension_numbers = #tpu.dot_dimension_numbers<[1], [0], [0], [1], [0, 0, 1, 1], [], []>} : vector<64x32xbf16>, vector<32x64xbf16>, vector<64x64xf32> -> vector<64x64xf32>
    %c0_47 = arith.constant 0 : index
    %c0_48 = arith.constant 0 : index
    %90 = vector.load %arg13[%c0_47, %c0_48] : memref<1x64xf32, #tpu.memory_space<vmem>>, vector<1x64xf32>
    %91 = vector.broadcast %90 : vector<1x64xf32> to vector<64x64xf32>
    %92 = arith.addf %89, %91 : vector<64x64xf32>
    %cst_49 = arith.constant 0.000000e+00 : f32
    %93 = vector.broadcast %cst_49 : f32 to vector<64x64xf32>
    %94 = arith.maximumf %92, %93 : vector<64x64xf32>
    %c0_50 = arith.constant 0 : index
    %c0_51 = arith.constant 0 : index
    %95 = vector.load %arg14[%c0_50, %c0_51] : memref<64x32xbf16, #tpu.memory_space<vmem>>, vector<64x32xbf16>
    %96 = arith.truncf %94 : vector<64x64xf32> to vector<64x64xbf16>
    %cst_52 = arith.constant dense<0.000000e+00> : vector<64x32xf32>
    %97 = tpu.matmul %96, %95, %cst_52 {dimension_numbers = #tpu.dot_dimension_numbers<[1], [0], [0], [1], [0, 0, 1, 1], [], []>} : vector<64x64xbf16>, vector<64x32xbf16>, vector<64x32xf32> -> vector<64x32xf32>
    %98 = arith.addf %86, %97 : vector<64x32xf32>
    %c0_53 = arith.constant 0 : index
    %c0_54 = arith.constant 0 : index
    %99 = vector.load %arg15[%c0_53, %c0_54] : memref<1x32xf32, #tpu.memory_space<vmem>>, vector<1x32xf32>
    %100 = vector.broadcast %99 : vector<1x32xf32> to vector<64x32xf32>
    %101 = arith.addf %98, %100 : vector<64x32xf32>
    %c0_55 = arith.constant 0 : index
    %c0_56 = arith.constant 0 : index
    %102 = vector.load %arg16[%c0_55, %c0_56] : memref<1x32xf32, #tpu.memory_space<vmem>>, vector<1x32xf32>
    %c0_57 = arith.constant 0 : index
    %c0_58 = arith.constant 0 : index
    %103 = vector.load %arg17[%c0_57, %c0_58] : memref<1x32xf32, #tpu.memory_space<vmem>>, vector<1x32xf32>
    %cst_59 = arith.constant dense<0.000000e+00> : vector<64xf32>
    %104 = vector.multi_reduction <add>, %101, %cst_59 [1] : vector<64x32xf32> to vector<64xf32>
    %105 = vector.shape_cast %104 : vector<64xf32> to vector<64x1xf32>
    %cst_60 = arith.constant 3.200000e+01 : f32
    %106 = vector.broadcast %cst_60 : f32 to vector<64x1xf32>
    %107 = arith.divf %105, %106 : vector<64x1xf32>
    %108 = vector.broadcast %107 : vector<64x1xf32> to vector<64x32xf32>
    %109 = arith.subf %101, %108 : vector<64x32xf32>
    %110 = arith.mulf %109, %109 : vector<64x32xf32>
    %cst_61 = arith.constant dense<0.000000e+00> : vector<64xf32>
    %111 = vector.multi_reduction <add>, %110, %cst_61 [1] : vector<64x32xf32> to vector<64xf32>
    %112 = vector.shape_cast %111 : vector<64xf32> to vector<64x1xf32>
    %cst_62 = arith.constant 3.200000e+01 : f32
    %113 = vector.broadcast %cst_62 : f32 to vector<64x1xf32>
    %114 = arith.divf %112, %113 : vector<64x1xf32>
    %115 = vector.broadcast %107 : vector<64x1xf32> to vector<64x32xf32>
    %116 = arith.subf %101, %115 : vector<64x32xf32>
    %cst_63 = arith.constant 9.99999974E-6 : f32
    %117 = vector.broadcast %cst_63 : f32 to vector<64x1xf32>
    %118 = arith.addf %114, %117 : vector<64x1xf32>
    %119 = math.rsqrt %118 : vector<64x1xf32>
    %120 = vector.broadcast %119 : vector<64x1xf32> to vector<64x32xf32>
    %121 = arith.mulf %116, %120 : vector<64x32xf32>
    %122 = vector.broadcast %102 : vector<1x32xf32> to vector<64x32xf32>
    %123 = arith.mulf %121, %122 : vector<64x32xf32>
    %124 = vector.broadcast %103 : vector<1x32xf32> to vector<64x32xf32>
    %125 = arith.addf %123, %124 : vector<64x32xf32>
    %126 = vector.shape_cast %125 : vector<64x32xf32> to vector<8x8x32xf32>
    %127 = vector.extract_strided_slice %126 {offsets = [0, 4, 0], sizes = [8, 1, 32], strides = [1, 1, 1]} : vector<8x8x32xf32> to vector<8x1x32xf32>
    %128 = vector.shape_cast %127 : vector<8x1x32xf32> to vector<8x32xf32>
    %c0_64 = arith.constant 0 : index
    %c0_65 = arith.constant 0 : index
    %129 = vector.load %arg18[%c0_64, %c0_65] : memref<1x32xf32, #tpu.memory_space<vmem>>, vector<1x32xf32>
    %c0_66 = arith.constant 0 : index
    %c0_67 = arith.constant 0 : index
    %130 = vector.load %arg19[%c0_66, %c0_67] : memref<1x32xf32, #tpu.memory_space<vmem>>, vector<1x32xf32>
    %cst_68 = arith.constant dense<0.000000e+00> : vector<8xf32>
    %131 = vector.multi_reduction <add>, %128, %cst_68 [1] : vector<8x32xf32> to vector<8xf32>
    %132 = vector.shape_cast %131 : vector<8xf32> to vector<8x1xf32>
    %cst_69 = arith.constant 3.200000e+01 : f32
    %133 = vector.broadcast %cst_69 : f32 to vector<8x1xf32>
    %134 = arith.divf %132, %133 : vector<8x1xf32>
    %135 = vector.broadcast %134 : vector<8x1xf32> to vector<8x32xf32>
    %136 = arith.subf %128, %135 : vector<8x32xf32>
    %137 = arith.mulf %136, %136 : vector<8x32xf32>
    %cst_70 = arith.constant dense<0.000000e+00> : vector<8xf32>
    %138 = vector.multi_reduction <add>, %137, %cst_70 [1] : vector<8x32xf32> to vector<8xf32>
    %139 = vector.shape_cast %138 : vector<8xf32> to vector<8x1xf32>
    %cst_71 = arith.constant 3.200000e+01 : f32
    %140 = vector.broadcast %cst_71 : f32 to vector<8x1xf32>
    %141 = arith.divf %139, %140 : vector<8x1xf32>
    %142 = vector.broadcast %134 : vector<8x1xf32> to vector<8x32xf32>
    %143 = arith.subf %128, %142 : vector<8x32xf32>
    %cst_72 = arith.constant 9.99999974E-6 : f32
    %144 = vector.broadcast %cst_72 : f32 to vector<8x1xf32>
    %145 = arith.addf %141, %144 : vector<8x1xf32>
    %146 = math.rsqrt %145 : vector<8x1xf32>
    %147 = vector.broadcast %146 : vector<8x1xf32> to vector<8x32xf32>
    %148 = arith.mulf %143, %147 : vector<8x32xf32>
    %149 = vector.broadcast %129 : vector<1x32xf32> to vector<8x32xf32>
    %150 = arith.mulf %148, %149 : vector<8x32xf32>
    %151 = vector.broadcast %130 : vector<1x32xf32> to vector<8x32xf32>
    %152 = arith.addf %150, %151 : vector<8x32xf32>
    %c0_73 = arith.constant 0 : index
    %c0_74 = arith.constant 0 : index
    %153 = vector.load %arg20[%c0_73, %c0_74] : memref<32x128xbf16, #tpu.memory_space<vmem>>, vector<32x128xbf16>
    %154 = arith.truncf %152 : vector<8x32xf32> to vector<8x32xbf16>
    %cst_75 = arith.constant dense<0.000000e+00> : vector<8x128xf32>
    %155 = tpu.matmul %154, %153, %cst_75 {dimension_numbers = #tpu.dot_dimension_numbers<[1], [0], [0], [1], [0, 0, 1, 1], [], []>} : vector<8x32xbf16>, vector<32x128xbf16>, vector<8x128xf32> -> vector<8x128xf32>
    %c0_76 = arith.constant 0 : index
    %c0_77 = arith.constant 0 : index
    %156 = vector.load %arg21[%c0_76, %c0_77] : memref<1x128xf32, #tpu.memory_space<vmem>>, vector<1x128xf32>
    %157 = vector.broadcast %156 : vector<1x128xf32> to vector<8x128xf32>
    %158 = arith.addf %155, %157 : vector<8x128xf32>
    %c0_78 = arith.constant 0 : index
    %c0_79 = arith.constant 0 : index
    %159 = vector.load %arg22[%c0_78, %c0_79] : memref<8x128xf32, #tpu.memory_space<vmem>>, vector<8x128xf32>
    tpu.vector_store %arg22[%c0_78, %c0_79], %158 {strides = array<i32>} : memref<8x128xf32, #tpu.memory_space<vmem>>, vector<8x128xf32>,
    return
  }
  func.func @transform_0(%arg0: i32) -> (i32, i32) {
    %c0_i32 = arith.constant 0 : i32
    %c0_i32_0 = arith.constant 0 : i32
    return %arg0, %c0_i32 : i32, i32
  }
  func.func @transform_1(%arg0: i32) -> (i32, i32) {
    %c0_i32 = arith.constant 0 : i32
    %c0_i32_0 = arith.constant 0 : i32
    return %arg0, %c0_i32 : i32, i32
  }
  func.func @transform_2(%arg0: i32) -> (i32, i32) {
    %c0_i32 = arith.constant 0 : i32
    %c0_i32_0 = arith.constant 0 : i32
    %c0_i32_1 = arith.constant 0 : i32
    return %c0_i32, %c0_i32_0 : i32, i32
  }
  func.func @transform_3(%arg0: i32) -> (i32, i32) {
    %c0_i32 = arith.constant 0 : i32
    %c0_i32_0 = arith.constant 0 : i32
    %c0_i32_1 = arith.constant 0 : i32
    return %c0_i32, %c0_i32_0 : i32, i32
  }
  func.func @transform_4(%arg0: i32) -> (i32, i32) {
    %c0_i32 = arith.constant 0 : i32
    %c0_i32_0 = arith.constant 0 : i32
    %c0_i32_1 = arith.constant 0 : i32
    return %c0_i32, %c0_i32_0 : i32, i32
  }
  func.func @transform_5(%arg0: i32) -> (i32, i32) {
    %c0_i32 = arith.constant 0 : i32
    %c0_i32_0 = arith.constant 0 : i32
    %c0_i32_1 = arith.constant 0 : i32
    return %c0_i32, %c0_i32_0 : i32, i32
  }
  func.func @transform_6(%arg0: i32) -> (i32, i32) {
    %c0_i32 = arith.constant 0 : i32
    %c0_i32_0 = arith.constant 0 : i32
    %c0_i32_1 = arith.constant 0 : i32
    return %c0_i32, %c0_i32_0 : i32, i32
  }
  func.func @transform_7(%arg0: i32) -> (i32, i32) {
    %c0_i32 = arith.constant 0 : i32
    %c0_i32_0 = arith.constant 0 : i32
    %c0_i32_1 = arith.constant 0 : i32
    return %c0_i32, %c0_i32_0 : i32, i32
  }
  func.func @transform_8(%arg0: i32) -> (i32, i32) {
    %c0_i32 = arith.constant 0 : i32
    %c0_i32_0 = arith.constant 0 : i32
    %c0_i32_1 = arith.constant 0 : i32
    return %c0_i32, %c0_i32_0 : i32, i32
  }
  func.func @transform_9(%arg0: i32) -> (i32, i32) {
    %c0_i32 = arith.constant 0 : i32
    %c0_i32_0 = arith.constant 0 : i32
    %c0_i32_1 = arith.constant 0 : i32
    return %c0_i32, %c0_i32_0 : i32, i32
  }
  func.func @transform_10(%arg0: i32) -> (i32, i32) {
    %c0_i32 = arith.constant 0 : i32
    %c0_i32_0 = arith.constant 0 : i32
    %c0_i32_1 = arith.constant 0 : i32
    return %c0_i32, %c0_i32_0 : i32, i32
  }
  func.func @transform_11(%arg0: i32) -> (i32, i32) {
    %c0_i32 = arith.constant 0 : i32
    %c0_i32_0 = arith.constant 0 : i32
    %c0_i32_1 = arith.constant 0 : i32
    return %c0_i32, %c0_i32_0 : i32, i32
  }
  func.func @transform_12(%arg0: i32) -> (i32, i32) {
    %c0_i32 = arith.constant 0 : i32
    %c0_i32_0 = arith.constant 0 : i32
    %c0_i32_1 = arith.constant 0 : i32
    return %c0_i32, %c0_i32_0 : i32, i32
  }
  func.func @transform_13(%arg0: i32) -> (i32, i32) {
    %c0_i32 = arith.constant 0 : i32
    %c0_i32_0 = arith.constant 0 : i32
    %c0_i32_1 = arith.constant 0 : i32
    return %c0_i32, %c0_i32_0 : i32, i32
  }
  func.func @transform_14(%arg0: i32) -> (i32, i32) {
    %c0_i32 = arith.constant 0 : i32
    %c0_i32_0 = arith.constant 0 : i32
    %c0_i32_1 = arith.constant 0 : i32
    return %c0_i32, %c0_i32_0 : i32, i32
  }
  func.func @transform_15(%arg0: i32) -> (i32, i32) {
    %c0_i32 = arith.constant 0 : i32
    %c0_i32_0 = arith.constant 0 : i32
    %c0_i32_1 = arith.constant 0 : i32
    return %c0_i32, %c0_i32_0 : i32, i32
  }
  func.func @transform_16(%arg0: i32) -> (i32, i32) {
    %c0_i32 = arith.constant 0 : i32
    %c0_i32_0 = arith.constant 0 : i32
    %c0_i32_1 = arith.constant 0 : i32
    return %c0_i32, %c0_i32_0 : i32, i32
  }
  func.func @transform_17(%arg0: i32) -> (i32, i32) {
    %c0_i32 = arith.constant 0 : i32
    %c0_i32_0 = arith.constant 0 : i32
    %c0_i32_1 = arith.constant 0 : i32
    return %c0_i32, %c0_i32_0 : i32, i32
  }
  func.func @transform_18(%arg0: i32) -> (i32, i32) {
    %c0_i32 = arith.constant 0 : i32
    %c0_i32_0 = arith.constant 0 : i32
    %c0_i32_1 = arith.constant 0 : i32
    return %c0_i32, %c0_i32_0 : i32, i32
  }
  func.func @transform_19(%arg0: i32) -> (i32, i32) {
    %c0_i32 = arith.constant 0 : i32
    %c0_i32_0 = arith.constant 0 : i32
    %c0_i32_1 = arith.constant 0 : i32
    return %c0_i32, %c0_i32_0 : i32, i32
  }
  func.func @transform_20(%arg0: i32) -> (i32, i32) {
    %c0_i32 = arith.constant 0 : i32
    %c0_i32_0 = arith.constant 0 : i32
    %c0_i32_1 = arith.constant 0 : i32
    return %c0_i32, %c0_i32_0 : i32, i32
  }
  func.func @transform_21(%arg0: i32) -> (i32, i32) {
    %c0_i32 = arith.constant 0 : i32
    %c0_i32_0 = arith.constant 0 : i32
    return %arg0, %c0_i32 : i32, i32
  }
}

</mosaic_0001>

<llo_original>
// kernel: tpu_custom_call.1
$region0: #{tpu_custom_call.1}
  #allocation0 [shape = 'u32[]', space=smem, size = 0x4, offset = 0x4, fixed_abs, tag = 'smem constant byte address 0x4 - core index']
  #allocation1 [shape = 'u32[72,128]{1,0:T(1,128)}', space=vmem, size = 0x9000, scoped, tag = 'internal scratch']
  #allocation2 [shape = 'f32[8,8,32]{2,1,0:T(8,128)}', space=vmem, size = 0x8000, scoped, tag = 'scratch operand']
  %s0 = inlined_call_operand.vmem [shape: bf16[64,192], index: 0, kind: input, shape index: {}]
  %s1 = inlined_call_operand.vmem [shape: bf16[64,32], index: 1, kind: input, shape index: {}]
  %s2 = inlined_call_operand.vmem [shape: f32[1,32], index: 2, kind: input, shape index: {}]
  %s3 = inlined_call_operand.vmem [shape: bf16[192,32], index: 3, kind: input, shape index: {}]
  %s4 = inlined_call_operand.vmem [shape: f32[1,32], index: 4, kind: input, shape index: {}]
  %s5 = inlined_call_operand.vmem [shape: bf16[32,96], index: 5, kind: input, shape index: {}]
  %s6 = inlined_call_operand.vmem [shape: f32[1,96], index: 6, kind: input, shape index: {}]
  %s7 = inlined_call_operand.vmem [shape: bf16[32,32], index: 7, kind: input, shape index: {}]
  %s8 = inlined_call_operand.vmem [shape: f32[1,32], index: 8, kind: input, shape index: {}]
  %s9 = inlined_call_operand.vmem [shape: f32[1,32], index: 9, kind: input, shape index: {}]
  %s10 = inlined_call_operand.vmem [shape: f32[1,32], index: 10, kind: input, shape index: {}]
  %s11 = inlined_call_operand.vmem [shape: bf16[32,64], index: 11, kind: input, shape index: {}]
  %s12 = inlined_call_operand.vmem [shape: f32[1,64], index: 12, kind: input, shape index: {}]
  %s13 = inlined_call_operand.vmem [shape: bf16[64,32], index: 13, kind: input, shape index: {}]
  %s14 = inlined_call_operand.vmem [shape: f32[1,32], index: 14, kind: input, shape index: {}]
  %s15 = inlined_call_operand.vmem [shape: f32[1,32], index: 15, kind: input, shape index: {}]
  %s16 = inlined_call_operand.vmem [shape: f32[1,32], index: 16, kind: input, shape index: {}]
  %s17 = inlined_call_operand.vmem [shape: f32[1,32], index: 17, kind: input, shape index: {}]
  %s18 = inlined_call_operand.vmem [shape: f32[1,32], index: 18, kind: input, shape index: {}]
  %s19 = inlined_call_operand.vmem [shape: bf16[32,128], index: 19, kind: input, shape index: {}]
  %s20 = inlined_call_operand.vmem [shape: f32[1,128], index: 20, kind: input, shape index: {}]
  %s21 = inlined_call_operand.hbm [shape: f32[16,128], index: 21, kind: output, shape index: {}]
  %s22 = sld [smem:[#allocation0]]
  $region117: #{tpu_custom_call.1} parent=0
    _
  %s24 = ssub.s32 1, %s22
  %s25 = scalar_select 0, %s24, %s22
  $region1: #{tpu_custom_call.1} parent=0
    #allocation3 [shape = 'u8[8192]{0}', space=vmem, size = 0x2000, scoped, tag = 'output window, operand 0']
    #allocation4 [shape = 's32[2]{0}', space=sflag, size = 0x8, scoped, tag = 'scoped memory for tpu_custom_call.1']
    %26 = vsyncpa [#allocation4], 0
    %s27 = scalar_lea.sflag [#allocation4], 1
    %28 = vsyncpa %s27, 0
    loop: start=0, step=1, limit=4
    $region2: #{tpu_custom_call.1} parent=1 // loop_pre_header
      _
    $region3: #{tpu_custom_call.1} parent=1 // loop_header
      %s30 = sphi 0, %s34
      %p31 = scmp.ge.s32.totalorder %s30, 4
      %s40 = sphi 0, %s42
      %s43 = sphi 0, %s40
      %s44 = sphi 0, %s43
      %s60 = sphi 0, %s44
      %s66 = sphi 0, %s68
      %s69 = sphi 0, %s66
      %s70 = sphi 0, %s69
      %s86 = sphi 0, %s70
      %s90 = sphi 0, %s90
      %s92 = sphi 0, %s90
      %s93 = sphi 0, %s92
      %s107 = sphi 0, %s93
      %s111 = sphi 0, %s111
      %s113 = sphi 0, %s111
      %s114 = sphi 0, %s113
      %s128 = sphi 0, %s114
      %s132 = sphi 0, %s132
      %s134 = sphi 0, %s132
      %s135 = sphi 0, %s134
      %s149 = sphi 0, %s135
      %s153 = sphi 0, %s153
      %s155 = sphi 0, %s153
      %s156 = sphi 0, %s155
      %s170 = sphi 0, %s156
      %s174 = sphi 0, %s174
      %s176 = sphi 0, %s174
      %s177 = sphi 0, %s176
      %s191 = sphi 0, %s177
      %s195 = sphi 0, %s195
      %s197 = sphi 0, %s195
      %s198 = sphi 0, %s197
      %s212 = sphi 0, %s198
      %s216 = sphi 0, %s216
      %s218 = sphi 0, %s216
      %s219 = sphi 0, %s218
      %s233 = sphi 0, %s219
      %s237 = sphi 0, %s237
      %s239 = sphi 0, %s237
      %s240 = sphi 0, %s239
      %s254 = sphi 0, %s240
      %s258 = sphi 0, %s258
      %s260 = sphi 0, %s258
      %s261 = sphi 0, %s260
      %s275 = sphi 0, %s261
      %s279 = sphi 0, %s279
      %s281 = sphi 0, %s279
      %s282 = sphi 0, %s281
      %s296 = sphi 0, %s282
      %s300 = sphi 0, %s300
      %s302 = sphi 0, %s300
      %s303 = sphi 0, %s302
      %s317 = sphi 0, %s303
      %s321 = sphi 0, %s321
      %s323 = sphi 0, %s321
      %s324 = sphi 0, %s323
      %s338 = sphi 0, %s324
      %s342 = sphi 0, %s342
      %s344 = sphi 0, %s342
      %s345 = sphi 0, %s344
      %s359 = sphi 0, %s345
      %s363 = sphi 0, %s363
      %s365 = sphi 0, %s363
      %s366 = sphi 0, %s365
      %s380 = sphi 0, %s366
      %s384 = sphi 0, %s384
      %s386 = sphi 0, %s384
      %s387 = sphi 0, %s386
      %s401 = sphi 0, %s387
      %s405 = sphi 0, %s405
      %s407 = sphi 0, %s405
      %s408 = sphi 0, %s407
      %s422 = sphi 0, %s408
      %s426 = sphi 0, %s426
      %s428 = sphi 0, %s426
      %s429 = sphi 0, %s428
      %s443 = sphi 0, %s429
      %s447 = sphi 0, %s447
      %s449 = sphi 0, %s447
      %s450 = sphi 0, %s449
      %s464 = sphi 0, %s450
      %s468 = sphi 0, %s468
      %s470 = sphi 0, %s468
      %s471 = sphi 0, %s470
      %s485 = sphi 0, %s471
      %s491 = sphi 0, %s493
      %s494 = sphi 0, %s491
      %s495 = sphi 0, %s494
      %s511 = sphi 0, %s495
    $region4: #{tpu_custom_call.1} parent=1 // loop_header_branch
      %33 = sbr.rel (%p31) target = $region8
    $region5: #{tpu_custom_call.1} parent=1 // loop_body
      %s35 = ssub.s32 %s30, 1
      %s36 = ssub.s32 %s30, 2
      %s37 = sadd.s32 %s30, 1
      %s38 = ssub.s32 %s30, %s37
      %p39 = scmp.eq.s32.totalorder %s38, 0
      %s41 = sadd.s32 %s40, 1
      %s42 = scalar_select %p39, %s40, %s41
      %p45 = pneg %p39
      %p46 = scmp.eq.s32.totalorder %s30, 1
      %p47 = por %p45, %p46
      %p48 = scmp.ne.s32.totalorder %s40, %s43
      %p49 = scmp.eq.s32.totalorder %s30, 0
      %p50 = por %p48, %p49
      %p51 = scmp.ne.s32.totalorder %s40, %s43
      %p52 = scmp.eq.s32.totalorder %s35, 1
      %p53 = por %p51, %p52
      %p54 = scmp.ne.s32.totalorder %s43, %s44
      %p55 = scmp.eq.s32.totalorder %s35, 0
      %p56 = por %p54, %p55
      %p57 = scmp.ne.s32.totalorder %s43, %s44
      %p58 = scmp.eq.s32.totalorder %s36, 1
      %p59 = por %p57, %p58
      %p61 = scmp.ne.s32.totalorder %s44, %s60
      %p62 = scmp.eq.s32.totalorder %s36, 0
      %p63 = por %p61, %p62
      %s64 = ssub.s32 %s30, %s37
      %p65 = scmp.eq.s32.totalorder %s64, 0
      %s67 = sadd.s32 %s66, 1
      %s68 = scalar_select %p65, %s66, %s67
      %p71 = pneg %p65
      %p72 = scmp.eq.s32.totalorder %s30, 1
      %p73 = por %p71, %p72
      %p74 = scmp.ne.s32.totalorder %s66, %s69
      %p75 = scmp.eq.s32.totalorder %s30, 0
      %p76 = por %p74, %p75
      %p77 = scmp.ne.s32.totalorder %s66, %s69
      %p78 = scmp.eq.s32.totalorder %s35, 1
      %p79 = por %p77, %p78
      %p80 = scmp.ne.s32.totalorder %s69, %s70
      %p81 = scmp.eq.s32.totalorder %s35, 0
      %p82 = por %p80, %p81
      %p83 = scmp.ne.s32.totalorder %s69, %s70
      %p84 = scmp.eq.s32.totalorder %s36, 1
      %p85 = por %p83, %p84
      %p87 = scmp.ne.s32.totalorder %s70, %s86
      %p88 = scmp.eq.s32.totalorder %s36, 0
      %p89 = por %p87, %p88
      %s91 = sadd.s32 %s90, 1
      %p94 = scmp.eq.s32.totalorder %s30, 1
      %p95 = scmp.ne.s32.totalorder %s90, %s92
      %p96 = scmp.eq.s32.totalorder %s30, 0
      %p97 = por %p95, %p96
      %p98 = scmp.ne.s32.totalorder %s90, %s92
      %p99 = scmp.eq.s32.totalorder %s35, 1
      %p100 = por %p98, %p99
      %p101 = scmp.ne.s32.totalorder %s92, %s93
      %p102 = scmp.eq.s32.totalorder %s35, 0
      %p103 = por %p101, %p102
      %p104 = scmp.ne.s32.totalorder %s92, %s93
      %p105 = scmp.eq.s32.totalorder %s36, 1
      %p106 = por %p104, %p105
      %p108 = scmp.ne.s32.totalorder %s93, %s107
      %p109 = scmp.eq.s32.totalorder %s36, 0
      %p110 = por %p108, %p109
      %s112 = sadd.s32 %s111, 1
      %p115 = scmp.eq.s32.totalorder %s30, 1
      %p116 = scmp.ne.s32.totalorder %s111, %s113
      %p117 = scmp.eq.s32.totalorder %s30, 0
      %p118 = por %p116, %p117
      %p119 = scmp.ne.s32.totalorder %s111, %s113
      %p120 = scmp.eq.s32.totalorder %s35, 1
      %p121 = por %p119, %p120
      %p122 = scmp.ne.s32.totalorder %s113, %s114
      %p123 = scmp.eq.s32.totalorder %s35, 0
      %p124 = por %p122, %p123
      %p125 = scmp.ne.s32.totalorder %s113, %s114
      %p126 = scmp.eq.s32.totalorder %s36, 1
      %p127 = por %p125, %p126
      %p129 = scmp.ne.s32.totalorder %s114, %s128
      %p130 = scmp.eq.s32.totalorder %s36, 0
      %p131 = por %p129, %p130
      %s133 = sadd.s32 %s132, 1
      %p136 = scmp.eq.s32.totalorder %s30, 1
      %p137 = scmp.ne.s32.totalorder %s132, %s134
      %p138 = scmp.eq.s32.totalorder %s30, 0
      %p139 = por %p137, %p138
      %p140 = scmp.ne.s32.totalorder %s132, %s134
      %p141 = scmp.eq.s32.totalorder %s35, 1
      %p142 = por %p140, %p141
      %p143 = scmp.ne.s32.totalorder %s134, %s135
      %p144 = scmp.eq.s32.totalorder %s35, 0
      %p145 = por %p143, %p144
      %p146 = scmp.ne.s32.totalorder %s134, %s135
      %p147 = scmp.eq.s32.totalorder %s36, 1
      %p148 = por %p146, %p147
      %p150 = scmp.ne.s32.totalorder %s135, %s149
      %p151 = scmp.eq.s32.totalorder %s36, 0
      %p152 = por %p150, %p151
      %s154 = sadd.s32 %s153, 1
      %p157 = scmp.eq.s32.totalorder %s30, 1
      %p158 = scmp.ne.s32.totalorder %s153, %s155
      %p159 = scmp.eq.s32.totalorder %s30, 0
      %p160 = por %p158, %p159
      %p161 = scmp.ne.s32.totalorder %s153, %s155
      %p162 = scmp.eq.s32.totalorder %s35, 1
      %p163 = por %p161, %p162
      %p164 = scmp.ne.s32.totalorder %s155, %s156
      %p165 = scmp.eq.s32.totalorder %s35, 0
      %p166 = por %p164, %p165
      %p167 = scmp.ne.s32.totalorder %s155, %s156
      %p168 = scmp.eq.s32.totalorder %s36, 1
      %p169 = por %p167, %p168
      %p171 = scmp.ne.s32.totalorder %s156, %s170
      %p172 = scmp.eq.s32.totalorder %s36, 0
      %p173 = por %p171, %p172
      %s175 = sadd.s32 %s174, 1
      %p178 = scmp.eq.s32.totalorder %s30, 1
      %p179 = scmp.ne.s32.totalorder %s174, %s176
      %p180 = scmp.eq.s32.totalorder %s30, 0
      %p181 = por %p179, %p180
      %p182 = scmp.ne.s32.totalorder %s174, %s176
      %p183 = scmp.eq.s32.totalorder %s35, 1
      %p184 = por %p182, %p183
      %p185 = scmp.ne.s32.totalorder %s176, %s177
      %p186 = scmp.eq.s32.totalorder %s35, 0
      %p187 = por %p185, %p186
      %p188 = scmp.ne.s32.totalorder %s176, %s177
      %p189 = scmp.eq.s32.totalorder %s36, 1
      %p190 = por %p188, %p189
      %p192 = scmp.ne.s32.totalorder %s177, %s191
      %p193 = scmp.eq.s32.totalorder %s36, 0
      %p194 = por %p192, %p193
      %s196 = sadd.s32 %s195, 1
      %p199 = scmp.eq.s32.totalorder %s30, 1
      %p200 = scmp.ne.s32.totalorder %s195, %s197
      %p201 = scmp.eq.s32.totalorder %s30, 0
      %p202 = por %p200, %p201
      %p203 = scmp.ne.s32.totalorder %s195, %s197
      %p204 = scmp.eq.s32.totalorder %s35, 1
      %p205 = por %p203, %p204
      %p206 = scmp.ne.s32.totalorder %s197, %s198
      %p207 = scmp.eq.s32.totalorder %s35, 0
      %p208 = por %p206, %p207
      %p209 = scmp.ne.s32.totalorder %s197, %s198
      %p210 = scmp.eq.s32.totalorder %s36, 1
      %p211 = por %p209, %p210
      %p213 = scmp.ne.s32.totalorder %s198, %s212
      %p214 = scmp.eq.s32.totalorder %s36, 0
      %p215 = por %p213, %p214
      %s217 = sadd.s32 %s216, 1
      %p220 = scmp.eq.s32.totalorder %s30, 1
      %p221 = scmp.ne.s32.totalorder %s216, %s218
      %p222 = scmp.eq.s32.totalorder %s30, 0
      %p223 = por %p221, %p222
      %p224 = scmp.ne.s32.totalorder %s216, %s218
      %p225 = scmp.eq.s32.totalorder %s35, 1
      %p226 = por %p224, %p225
      %p227 = scmp.ne.s32.totalorder %s218, %s219
      %p228 = scmp.eq.s32.totalorder %s35, 0
      %p229 = por %p227, %p228
      %p230 = scmp.ne.s32.totalorder %s218, %s219
      %p231 = scmp.eq.s32.totalorder %s36, 1
      %p232 = por %p230, %p231
      %p234 = scmp.ne.s32.totalorder %s219, %s233
      %p235 = scmp.eq.s32.totalorder %s36, 0
      %p236 = por %p234, %p235
      %s238 = sadd.s32 %s237, 1
      %p241 = scmp.eq.s32.totalorder %s30, 1
      %p242 = scmp.ne.s32.totalorder %s237, %s239
      %p243 = scmp.eq.s32.totalorder %s30, 0
      %p244 = por %p242, %p243
      %p245 = scmp.ne.s32.totalorder %s237, %s239
      %p246 = scmp.eq.s32.totalorder %s35, 1
      %p247 = por %p245, %p246
      %p248 = scmp.ne.s32.totalorder %s239, %s240
      %p249 = scmp.eq.s32.totalorder %s35, 0
      %p250 = por %p248, %p249
      %p251 = scmp.ne.s32.totalorder %s239, %s240
      %p252 = scmp.eq.s32.totalorder %s36, 1
      %p253 = por %p251, %p252
      %p255 = scmp.ne.s32.totalorder %s240, %s254
      %p256 = scmp.eq.s32.totalorder %s36, 0
      %p257 = por %p255, %p256
      %s259 = sadd.s32 %s258, 1
      %p262 = scmp.eq.s32.totalorder %s30, 1
      %p263 = scmp.ne.s32.totalorder %s258, %s260
      %p264 = scmp.eq.s32.totalorder %s30, 0
      %p265 = por %p263, %p264
      %p266 = scmp.ne.s32.totalorder %s258, %s260
      %p267 = scmp.eq.s32.totalorder %s35, 1
      %p268 = por %p266, %p267
      %p269 = scmp.ne.s32.totalorder %s260, %s261
      %p270 = scmp.eq.s32.totalorder %s35, 0
      %p271 = por %p269, %p270
      %p272 = scmp.ne.s32.totalorder %s260, %s261
      %p273 = scmp.eq.s32.totalorder %s36, 1
      %p274 = por %p272, %p273
      %p276 = scmp.ne.s32.totalorder %s261, %s275
      %p277 = scmp.eq.s32.totalorder %s36, 0
      %p278 = por %p276, %p277
      %s280 = sadd.s32 %s279, 1
      %p283 = scmp.eq.s32.totalorder %s30, 1
      %p284 = scmp.ne.s32.totalorder %s279, %s281
      %p285 = scmp.eq.s32.totalorder %s30, 0
      %p286 = por %p284, %p285
      %p287 = scmp.ne.s32.totalorder %s279, %s281
      %p288 = scmp.eq.s32.totalorder %s35, 1
      %p289 = por %p287, %p288
      %p290 = scmp.ne.s32.totalorder %s281, %s282
      %p291 = scmp.eq.s32.totalorder %s35, 0
      %p292 = por %p290, %p291
      %p293 = scmp.ne.s32.totalorder %s281, %s282
      %p294 = scmp.eq.s32.totalorder %s36, 1
      %p295 = por %p293, %p294
      %p297 = scmp.ne.s32.totalorder %s282, %s296
      %p298 = scmp.eq.s32.totalorder %s36, 0
      %p299 = por %p297, %p298
      %s301 = sadd.s32 %s300, 1
      %p304 = scmp.eq.s32.totalorder %s30, 1
      %p305 = scmp.ne.s32.totalorder %s300, %s302
      %p306 = scmp.eq.s32.totalorder %s30, 0
      %p307 = por %p305, %p306
      %p308 = scmp.ne.s32.totalorder %s300, %s302
      %p309 = scmp.eq.s32.totalorder %s35, 1
      %p310 = por %p308, %p309
      %p311 = scmp.ne.s32.totalorder %s302, %s303
      %p312 = scmp.eq.s32.totalorder %s35, 0
      %p313 = por %p311, %p312
      %p314 = scmp.ne.s32.totalorder %s302, %s303
      %p315 = scmp.eq.s32.totalorder %s36, 1
      %p316 = por %p314, %p315
      %p318 = scmp.ne.s32.totalorder %s303, %s317
      %p319 = scmp.eq.s32.totalorder %s36, 0
      %p320 = por %p318, %p319
      %s322 = sadd.s32 %s321, 1
      %p325 = scmp.eq.s32.totalorder %s30, 1
      %p326 = scmp.ne.s32.totalorder %s321, %s323
      %p327 = scmp.eq.s32.totalorder %s30, 0
      %p328 = por %p326, %p327
      %p329 = scmp.ne.s32.totalorder %s321, %s323
      %p330 = scmp.eq.s32.totalorder %s35, 1
      %p331 = por %p329, %p330
      %p332 = scmp.ne.s32.totalorder %s323, %s324
      %p333 = scmp.eq.s32.totalorder %s35, 0
      %p334 = por %p332, %p333
      %p335 = scmp.ne.s32.totalorder %s323, %s324
      %p336 = scmp.eq.s32.totalorder %s36, 1
      %p337 = por %p335, %p336
      %p339 = scmp.ne.s32.totalorder %s324, %s338
      %p340 = scmp.eq.s32.totalorder %s36, 0
      %p341 = por %p339, %p340
      %s343 = sadd.s32 %s342, 1
      %p346 = scmp.eq.s32.totalorder %s30, 1
      %p347 = scmp.ne.s32.totalorder %s342, %s344
      %p348 = scmp.eq.s32.totalorder %s30, 0
      %p349 = por %p347, %p348
      %p350 = scmp.ne.s32.totalorder %s342, %s344
      %p351 = scmp.eq.s32.totalorder %s35, 1
      %p352 = por %p350, %p351
      %p353 = scmp.ne.s32.totalorder %s344, %s345
      %p354 = scmp.eq.s32.totalorder %s35, 0
      %p355 = por %p353, %p354
      %p356 = scmp.ne.s32.totalorder %s344, %s345
      %p357 = scmp.eq.s32.totalorder %s36, 1
      %p358 = por %p356, %p357
      %p360 = scmp.ne.s32.totalorder %s345, %s359
      %p361 = scmp.eq.s32.totalorder %s36, 0
      %p362 = por %p360, %p361
      %s364 = sadd.s32 %s363, 1
      %p367 = scmp.eq.s32.totalorder %s30, 1
      %p368 = scmp.ne.s32.totalorder %s363, %s365
      %p369 = scmp.eq.s32.totalorder %s30, 0
      %p370 = por %p368, %p369
      %p371 = scmp.ne.s32.totalorder %s363, %s365
      %p372 = scmp.eq.s32.totalorder %s35, 1
      %p373 = por %p371, %p372
      %p374 = scmp.ne.s32.totalorder %s365, %s366
      %p375 = scmp.eq.s32.totalorder %s35, 0
      %p376 = por %p374, %p375
      %p377 = scmp.ne.s32.totalorder %s365, %s366
      %p378 = scmp.eq.s32.totalorder %s36, 1
      %p379 = por %p377, %p378
      %p381 = scmp.ne.s32.totalorder %s366, %s380
      %p382 = scmp.eq.s32.totalorder %s36, 0
      %p383 = por %p381, %p382
      %s385 = sadd.s32 %s384, 1
      %p388 = scmp.eq.s32.totalorder %s30, 1
      %p389 = scmp.ne.s32.totalorder %s384, %s386
      %p390 = scmp.eq.s32.totalorder %s30, 0
      %p391 = por %p389, %p390
      %p392 = scmp.ne.s32.totalorder %s384, %s386
      %p393 = scmp.eq.s32.totalorder %s35, 1
      %p394 = por %p392, %p393
      %p395 = scmp.ne.s32.totalorder %s386, %s387
      %p396 = scmp.eq.s32.totalorder %s35, 0
      %p397 = por %p395, %p396
      %p398 = scmp.ne.s32.totalorder %s386, %s387
      %p399 = scmp.eq.s32.totalorder %s36, 1
      %p400 = por %p398, %p399
      %p402 = scmp.ne.s32.totalorder %s387, %s401
      %p403 = scmp.eq.s32.totalorder %s36, 0
      %p404 = por %p402, %p403
      %s406 = sadd.s32 %s405, 1
      %p409 = scmp.eq.s32.totalorder %s30, 1
      %p410 = scmp.ne.s32.totalorder %s405, %s407
      %p411 = scmp.eq.s32.totalorder %s30, 0
      %p412 = por %p410, %p411
      %p413 = scmp.ne.s32.totalorder %s405, %s407
      %p414 = scmp.eq.s32.totalorder %s35, 1
      %p415 = por %p413, %p414
      %p416 = scmp.ne.s32.totalorder %s407, %s408
      %p417 = scmp.eq.s32.totalorder %s35, 0
      %p418 = por %p416, %p417
      %p419 = scmp.ne.s32.totalorder %s407, %s408
      %p420 = scmp.eq.s32.totalorder %s36, 1
      %p421 = por %p419, %p420
      %p423 = scmp.ne.s32.totalorder %s408, %s422
      %p424 = scmp.eq.s32.totalorder %s36, 0
      %p425 = por %p423, %p424
      %s427 = sadd.s32 %s426, 1
      %p430 = scmp.eq.s32.totalorder %s30, 1
      %p431 = scmp.ne.s32.totalorder %s426, %s428
      %p432 = scmp.eq.s32.totalorder %s30, 0
      %p433 = por %p431, %p432
      %p434 = scmp.ne.s32.totalorder %s426, %s428
      %p435 = scmp.eq.s32.totalorder %s35, 1
      %p436 = por %p434, %p435
      %p437 = scmp.ne.s32.totalorder %s428, %s429
      %p438 = scmp.eq.s32.totalorder %s35, 0
      %p439 = por %p437, %p438
      %p440 = scmp.ne.s32.totalorder %s428, %s429
      %p441 = scmp.eq.s32.totalorder %s36, 1
      %p442 = por %p440, %p441
      %p444 = scmp.ne.s32.totalorder %s429, %s443
      %p445 = scmp.eq.s32.totalorder %s36, 0
      %p446 = por %p444, %p445
      %s448 = sadd.s32 %s447, 1
      %p451 = scmp.eq.s32.totalorder %s30, 1
      %p452 = scmp.ne.s32.totalorder %s447, %s449
      %p453 = scmp.eq.s32.totalorder %s30, 0
      %p454 = por %p452, %p453
      %p455 = scmp.ne.s32.totalorder %s447, %s449
      %p456 = scmp.eq.s32.totalorder %s35, 1
      %p457 = por %p455, %p456
      %p458 = scmp.ne.s32.totalorder %s449, %s450
      %p459 = scmp.eq.s32.totalorder %s35, 0
      %p460 = por %p458, %p459
      %p461 = scmp.ne.s32.totalorder %s449, %s450
      %p462 = scmp.eq.s32.totalorder %s36, 1
      %p463 = por %p461, %p462
      %p465 = scmp.ne.s32.totalorder %s450, %s464
      %p466 = scmp.eq.s32.totalorder %s36, 0
      %p467 = por %p465, %p466
      %s469 = sadd.s32 %s468, 1
      %p472 = scmp.eq.s32.totalorder %s30, 1
      %p473 = scmp.ne.s32.totalorder %s468, %s470
      %p474 = scmp.eq.s32.totalorder %s30, 0
      %p475 = por %p473, %p474
      %p476 = scmp.ne.s32.totalorder %s468, %s470
      %p477 = scmp.eq.s32.totalorder %s35, 1
      %p478 = por %p476, %p477
      %p479 = scmp.ne.s32.totalorder %s470, %s471
      %p480 = scmp.eq.s32.totalorder %s35, 0
      %p481 = por %p479, %p480
      %p482 = scmp.ne.s32.totalorder %s470, %s471
      %p483 = scmp.eq.s32.totalorder %s36, 1
      %p484 = por %p482, %p483
      %p486 = scmp.ne.s32.totalorder %s471, %s485
      %p487 = scmp.eq.s32.totalorder %s36, 0
      %p488 = por %p486, %p487
      %s489 = ssub.s32 %s30, %s37
      %p490 = scmp.eq.s32.totalorder %s489, 0
      %s492 = sadd.s32 %s491, 1
      %s493 = scalar_select %p490, %s491, %s492
      %p496 = pneg %p490
      %p497 = scmp.eq.s32.totalorder %s30, 1
      %p498 = por %p496, %p497
      %p499 = scmp.ne.s32.totalorder %s491, %s494
      %p500 = scmp.eq.s32.totalorder %s30, 0
      %p501 = por %p499, %p500
      %p502 = scmp.ne.s32.totalorder %s491, %s494
      %p503 = scmp.eq.s32.totalorder %s35, 1
      %p504 = por %p502, %p503
      %p505 = scmp.ne.s32.totalorder %s494, %s495
      %p506 = scmp.eq.s32.totalorder %s35, 0
      %p507 = por %p505, %p506
      %p508 = scmp.ne.s32.totalorder %s494, %s495
      %p509 = scmp.eq.s32.totalorder %s36, 1
      %p510 = por %p508, %p509
      %p512 = scmp.ne.s32.totalorder %s495, %s511
      %p513 = scmp.eq.s32.totalorder %s36, 0
      %p514 = por %p512, %p513
      %p515 = scmp.le.s32.totalorder 1, %s30
      %p516 = scmp.lt.s32.totalorder %s30, 3
      %p517 = pnand %p515, %p516
      %p518 = pneg %p517
      // Predicated region
      $region9: #{tpu_custom_call.1} parent=5 // pred_check
        _
      $region10: #{tpu_custom_call.1} parent=5 // pred_check_branch
        %520 = sbr.rel (%p517) target = $region12
      $region11: #{tpu_custom_call.1} parent=5 // pred_region
        %s521 = ssub.s32 %s30, 1
        // Predicated region
        $region13: #{tpu_custom_call.1} parent=11 // pred_check
          %p522 = pneg %p103
        $region14: #{tpu_custom_call.1} parent=11 // pred_check_branch
          %524 = sbr.rel (%p522) target = $region16
        $region15: #{tpu_custom_call.1} parent=11 // pred_region
          _
        $region16: #{tpu_custom_call.1} parent=11 // pred_fallthru
          _
        // Predicated region
        $region17: #{tpu_custom_call.1} parent=11 // pred_check
          %p525 = pneg %p124
        $region18: #{tpu_custom_call.1} parent=11 // pred_check_branch
          %527 = sbr.rel (%p525) target = $region20
        $region19: #{tpu_custom_call.1} parent=11 // pred_region
          _
        $region20: #{tpu_custom_call.1} parent=11 // pred_fallthru
          _
        // Predicated region
        $region21: #{tpu_custom_call.1} parent=11 // pred_check
          %p528 = pneg %p145
        $region22: #{tpu_custom_call.1} parent=11 // pred_check_branch
          %530 = sbr.rel (%p528) target = $region24
        $region23: #{tpu_custom_call.1} parent=11 // pred_region
          _
        $region24: #{tpu_custom_call.1} parent=11 // pred_fallthru
          _
        // Predicated region
        $region25: #{tpu_custom_call.1} parent=11 // pred_check
          %p531 = pneg %p166
        $region26: #{tpu_custom_call.1} parent=11 // pred_check_branch
          %533 = sbr.rel (%p531) target = $region28
        $region27: #{tpu_custom_call.1} parent=11 // pred_region
          _
        $region28: #{tpu_custom_call.1} parent=11 // pred_fallthru
          _
        // Predicated region
        $region29: #{tpu_custom_call.1} parent=11 // pred_check
          %p534 = pneg %p187
        $region30: #{tpu_custom_call.1} parent=11 // pred_check_branch
          %536 = sbr.rel (%p534) target = $region32
        $region31: #{tpu_custom_call.1} parent=11 // pred_region
          _
        $region32: #{tpu_custom_call.1} parent=11 // pred_fallthru
          _
        // Predicated region
        $region33: #{tpu_custom_call.1} parent=11 // pred_check
          %p537 = pneg %p208
        $region34: #{tpu_custom_call.1} parent=11 // pred_check_branch
          %539 = sbr.rel (%p537) target = $region36
        $region35: #{tpu_custom_call.1} parent=11 // pred_region
          _
        $region36: #{tpu_custom_call.1} parent=11 // pred_fallthru
          _
        // Predicated region
        $region37: #{tpu_custom_call.1} parent=11 // pred_check
          %p540 = pneg %p229
        $region38: #{tpu_custom_call.1} parent=11 // pred_check_branch
          %542 = sbr.rel (%p540) target = $region40
        $region39: #{tpu_custom_call.1} parent=11 // pred_region
          _
        $region40: #{tpu_custom_call.1} parent=11 // pred_fallthru
          _
        // Predicated region
        $region41: #{tpu_custom_call.1} parent=11 // pred_check
          %p543 = pneg %p250
        $region42: #{tpu_custom_call.1} parent=11 // pred_check_branch
          %545 = sbr.rel (%p543) target = $region44
        $region43: #{tpu_custom_call.1} parent=11 // pred_region
          _
        $region44: #{tpu_custom_call.1} parent=11 // pred_fallthru
          _
        // Predicated region
        $region45: #{tpu_custom_call.1} parent=11 // pred_check
          %p546 = pneg %p271
        $region46: #{tpu_custom_call.1} parent=11 // pred_check_branch
          %548 = sbr.rel (%p546) target = $region48
        $region47: #{tpu_custom_call.1} parent=11 // pred_region
          _
        $region48: #{tpu_custom_call.1} parent=11 // pred_fallthru
          _
        // Predicated region
        $region49: #{tpu_custom_call.1} parent=11 // pred_check
          %p549 = pneg %p292
        $region50: #{tpu_custom_call.1} parent=11 // pred_check_branch
          %551 = sbr.rel (%p549) target = $region52
        $region51: #{tpu_custom_call.1} parent=11 // pred_region
          _
        $region52: #{tpu_custom_call.1} parent=11 // pred_fallthru
          _
        // Predicated region
        $region53: #{tpu_custom_call.1} parent=11 // pred_check
          %p552 = pneg %p313
        $region54: #{tpu_custom_call.1} parent=11 // pred_check_branch
          %554 = sbr.rel (%p552) target = $region56
        $region55: #{tpu_custom_call.1} parent=11 // pred_region
          _
        $region56: #{tpu_custom_call.1} parent=11 // pred_fallthru
          _
        // Predicated region
        $region57: #{tpu_custom_call.1} parent=11 // pred_check
          %p555 = pneg %p334
        $region58: #{tpu_custom_call.1} parent=11 // pred_check_branch
          %557 = sbr.rel (%p555) target = $region60
        $region59: #{tpu_custom_call.1} parent=11 // pred_region
          _
        $region60: #{tpu_custom_call.1} parent=11 // pred_fallthru
          _
        // Predicated region
        $region61: #{tpu_custom_call.1} parent=11 // pred_check
          %p558 = pneg %p355
        $region62: #{tpu_custom_call.1} parent=11 // pred_check_branch
          %560 = sbr.rel (%p558) target = $region64
        $region63: #{tpu_custom_call.1} parent=11 // pred_region
          _
        $region64: #{tpu_custom_call.1} parent=11 // pred_fallthru
          _
        // Predicated region
        $region65: #{tpu_custom_call.1} parent=11 // pred_check
          %p561 = pneg %p376
        $region66: #{tpu_custom_call.1} parent=11 // pred_check_branch
          %563 = sbr.rel (%p561) target = $region68
        $region67: #{tpu_custom_call.1} parent=11 // pred_region
          _
        $region68: #{tpu_custom_call.1} parent=11 // pred_fallthru
          _
        // Predicated region
        $region69: #{tpu_custom_call.1} parent=11 // pred_check
          %p564 = pneg %p397
        $region70: #{tpu_custom_call.1} parent=11 // pred_check_branch
          %566 = sbr.rel (%p564) target = $region72
        $region71: #{tpu_custom_call.1} parent=11 // pred_region
          _
        $region72: #{tpu_custom_call.1} parent=11 // pred_fallthru
          _
        // Predicated region
        $region73: #{tpu_custom_call.1} parent=11 // pred_check
          %p567 = pneg %p418
        $region74: #{tpu_custom_call.1} parent=11 // pred_check_branch
          %569 = sbr.rel (%p567) target = $region76
        $region75: #{tpu_custom_call.1} parent=11 // pred_region
          _
        $region76: #{tpu_custom_call.1} parent=11 // pred_fallthru
          _
        // Predicated region
        $region77: #{tpu_custom_call.1} parent=11 // pred_check
          %p570 = pneg %p439
        $region78: #{tpu_custom_call.1} parent=11 // pred_check_branch
          %572 = sbr.rel (%p570) target = $region80
        $region79: #{tpu_custom_call.1} parent=11 // pred_region
          _
        $region80: #{tpu_custom_call.1} parent=11 // pred_fallthru
          _
        // Predicated region
        $region81: #{tpu_custom_call.1} parent=11 // pred_check
          %p573 = pneg %p460
        $region82: #{tpu_custom_call.1} parent=11 // pred_check_branch
          %575 = sbr.rel (%p573) target = $region84
        $region83: #{tpu_custom_call.1} parent=11 // pred_region
          _
        $region84: #{tpu_custom_call.1} parent=11 // pred_fallthru
          _
        // Predicated region
        $region85: #{tpu_custom_call.1} parent=11 // pred_check
          %p576 = pneg %p481
        $region86: #{tpu_custom_call.1} parent=11 // pred_check_branch
          %578 = sbr.rel (%p576) target = $region88
        $region87: #{tpu_custom_call.1} parent=11 // pred_region
          _
        $region88: #{tpu_custom_call.1} parent=11 // pred_fallthru
          _
      $region12: #{tpu_custom_call.1} parent=5 // pred_fallthru
        _
      %p579 = scmp.lt.s32.totalorder %s30, 2
      // Predicated region
      $region89: #{tpu_custom_call.1} parent=5 // pred_check
        %p580 = pneg %p579
      $region90: #{tpu_custom_call.1} parent=5 // pred_check_branch
        %582 = sbr.rel (%p580) target = $region92
      $region91: #{tpu_custom_call.1} parent=5 // pred_region
        // Predicated region
        $region93: #{tpu_custom_call.1} parent=91 // pred_check
          %p583 = pneg %p50
        $region94: #{tpu_custom_call.1} parent=91 // pred_check_branch
          %585 = sbr.rel (%p583) target = $region96
        $region95: #{tpu_custom_call.1} parent=91 // pred_region
          %s586 = smul.u32 4, %s30
          %p587 = scmp.lt.s32.totalorder %s586, 7
          %s588 = scalar_select %p587, %s586, 7
          %s589 = smul.addr %s588, 2
          %s590 = smul.addr %s589, 4
          %s591 = scalar_lea.vmem %s0, %s590
          %s592 = smul.u32 4, %s30
        $region96: #{tpu_custom_call.1} parent=91 // pred_fallthru
          _
        // Predicated region
        $region97: #{tpu_custom_call.1} parent=91 // pred_check
          %p593 = pneg %p76
        $region98: #{tpu_custom_call.1} parent=91 // pred_check_branch
          %595 = sbr.rel (%p593) target = $region100
        $region99: #{tpu_custom_call.1} parent=91 // pred_region
          %s596 = smul.u32 4, %s30
          %p597 = scmp.lt.s32.totalorder %s596, 7
          %s598 = scalar_select %p597, %s596, 7
          %s599 = smul.addr %s598, 4
          %s600 = scalar_lea.vmem %s1, %s599
          %s601 = smul.u32 4, %s30
        $region100: #{tpu_custom_call.1} parent=91 // pred_fallthru
          _
      $region92: #{tpu_custom_call.1} parent=5 // pred_fallthru
        _
      %p602 = scmp.le.s32.totalorder 1, %s30
      %p603 = scmp.lt.s32.totalorder %s30, 3
      %p604 = pnand %p602, %p603
      %p605 = pneg %p604
      // Predicated region
      $region101: #{tpu_custom_call.1} parent=5 // pred_check
        _
      $region102: #{tpu_custom_call.1} parent=5 // pred_check_branch
        %607 = sbr.rel (%p604) target = $region104
      $region103: #{tpu_custom_call.1} parent=5 // pred_region
        %s608 = ssub.s32 %s30, 1
        %s609 = smul.u32 4, %s35
        %p610 = scmp.lt.s32.totalorder %s609, 7
        %s611 = scalar_select %p610, %s609, 7
        %s612 = smul.addr %s611, 2
        %s613 = smul.addr %s612, 4
        %s614 = scalar_lea.vmem %s0, %s613
        %p615 = pneg %p56
        %p616 = pneg %p53
        %s617 = smul.u32 4, %s35
        %p618 = scmp.lt.s32.totalorder %s617, 7
        %s619 = scalar_select %p618, %s617, 7
        %s620 = smul.addr %s619, 4
        %s621 = scalar_lea.vmem %s1, %s620
        %p622 = pneg %p82
        %p623 = pneg %p79
        %p624 = pneg %p103
        %p625 = pneg %p100
        %p626 = pneg %p124
        %p627 = pneg %p121
        %p628 = pneg %p145
        %p629 = pneg %p142
        %p630 = pneg %p166
        %p631 = pneg %p163
        %p632 = pneg %p187
        %p633 = pneg %p184
        %p634 = pneg %p208
        %p635 = pneg %p205
        %p636 = pneg %p229
        %p637 = pneg %p226
        %p638 = pneg %p250
        %p639 = pneg %p247
        %p640 = pneg %p271
        %p641 = pneg %p268
        %p642 = pneg %p292
        %p643 = pneg %p289
        %p644 = pneg %p313
        %p645 = pneg %p310
        %p646 = pneg %p334
        %p647 = pneg %p331
        %p648 = pneg %p355
        %p649 = pneg %p352
        %p650 = pneg %p376
        %p651 = pneg %p373
        %p652 = pneg %p397
        %p653 = pneg %p394
        %p654 = pneg %p418
        %p655 = pneg %p415
        %p656 = pneg %p439
        %p657 = pneg %p436
        %p658 = pneg %p460
        %p659 = pneg %p457
        %p660 = pneg %p481
        %p661 = pneg %p478
        %p662 = pneg %p507
        %p663 = pneg %p504
        %s664 = sand.u32 %s494, 1
        %s665 = scalar_lea.sflag [#allocation4], %s664
        %s666 = sand.u32 %s494, 1
        %s667 = smul.addr %s666, 8
        %s668 = scalar_lea.vmem [#allocation3], %s667
        %s669 = smul.u32 4, %s35
        %p670 = scmp.lt.s32.totalorder %s669, 7
        %s671 = scalar_select %p670, %s669, 7
        %s672 = smul.addr %s671, 2
        %s673 = smul.addr %s672, 4
        %s674 = scalar_lea.vmem %s0, %s673
        %s675 = smul.u32 4, %s35
        %s676 = smul.u32 4, %s35
        %p677 = scmp.lt.s32.totalorder %s676, 7
        %s678 = scalar_select %p677, %s676, 7
        %s679 = smul.addr %s678, 4
        %s680 = scalar_lea.vmem %s1, %s679
        %s681 = smul.u32 4, %s35
        %v683 = vld [vmem:[%s674] sm:$0xff]
        %v684 = vld [vmem:[%s674 + $0x8] sm:$0xff]
        %v685 = vld [vmem:[%s674 + $0x10] sm:$0xff]
        %v686 = vld [vmem:[%s674 + $0x18] sm:$0xff]
        %v687 = vld [vmem:[%s3] sm:$0xf]
        %v688 = vld [vmem:[%s3 + $0x4] sm:$0xf]
        %v689 = vld [vmem:[%s3 + $0x8] sm:$0xf]
        %v690 = vld [vmem:[%s3 + $0xc] sm:$0xf]
        %v691 = vld [vmem:[%s3 + $0x10] sm:$0xf]
        %v692 = vld [vmem:[%s3 + $0x14] sm:$0xf]
        %v693 = vld [vmem:[%s3 + $0x18] sm:$0xf]
        %v694 = vld [vmem:[%s3 + $0x1c] sm:$0xf]
        %v695 = vld [vmem:[%s3 + $0x20] sm:$0xf]
        %v696 = vld [vmem:[%s3 + $0x24] sm:$0xf]
        %v697 = vld [vmem:[%s3 + $0x28] sm:$0xf]
        %v698 = vld [vmem:[%s3 + $0x2c] sm:$0xf]
        %v699 = vld [vmem:[%s3 + $0x30] sm:$0xf]
        %v700 = vld [vmem:[%s3 + $0x34] sm:$0xf]
        %v701 = vld [vmem:[%s3 + $0x38] sm:$0xf]
        %v702 = vld [vmem:[%s3 + $0x3c] sm:$0xf]
        %v703 = vld [vmem:[%s3 + $0x40] sm:$0xf]
        %v704 = vld [vmem:[%s3 + $0x44] sm:$0xf]
        %v705 = vld [vmem:[%s3 + $0x48] sm:$0xf]
        %v706 = vld [vmem:[%s3 + $0x4c] sm:$0xf]
        %v707 = vld [vmem:[%s3 + $0x50] sm:$0xf]
        %v708 = vld [vmem:[%s3 + $0x54] sm:$0xf]
        %v709 = vld [vmem:[%s3 + $0x58] sm:$0xf]
        %v710 = vld [vmem:[%s3 + $0x5c] sm:$0xf]
        %v711 = vld [vmem:[%s4] sm:$0x1]
        %v713 = vperm.slane %v711, 0
        %v719 = vunpack.c.l.b16 %v683
        %v720 = vunpack.c.h.b16 %v683
        %v721 = vunpack.c.l.b16 %v684
        %v722 = vunpack.c.h.b16 %v684
        %v723 = vunpack.c.l.b16 %v685
        %v724 = vunpack.c.h.b16 %v685
        %v725 = vunpack.c.l.b16 %v686
        %v726 = vunpack.c.h.b16 %v686
        %v727 = vpack.c.b16 %v721, %v719
        %v728 = vpack.c.b16 %v722, %v720
        %v729 = vpack.c.b16 %v725, %v723
        %v730 = vpack.c.b16 %v726, %v724
        %v757 = vunpack.c.l.b16 %v687
        %v758 = vunpack.c.l.b16 %v688
        %v759 = vunpack.c.l.b16 %v689
        %v760 = vunpack.c.l.b16 %v690
        %v761 = vunpack.c.l.b16 %v691
        %v762 = vunpack.c.l.b16 %v692
        %v763 = vunpack.c.l.b16 %v693
        %v764 = vunpack.c.l.b16 %v694
        %v765 = vunpack.c.l.b16 %v695
        %v766 = vunpack.c.l.b16 %v696
        %v767 = vunpack.c.l.b16 %v697
        %v768 = vunpack.c.l.b16 %v698
        %v769 = vunpack.c.l.b16 %v699
        %v770 = vunpack.c.l.b16 %v700
        %v771 = vunpack.c.l.b16 %v701
        %v772 = vunpack.c.l.b16 %v702
        %v773 = vunpack.c.l.b16 %v703
        %v774 = vunpack.c.l.b16 %v704
        %v775 = vunpack.c.l.b16 %v705
        %v776 = vunpack.c.l.b16 %v706
        %v777 = vunpack.c.l.b16 %v707
        %v778 = vunpack.c.l.b16 %v708
        %v779 = vunpack.c.l.b16 %v709
        %v780 = vunpack.c.l.b16 %v710
        %v781 = vpack.c.b16 %v758, %v757
        %v782 = vpack.c.b16 %v760, %v759
        %v783 = vpack.c.b16 %v762, %v761
        %v784 = vpack.c.b16 %v764, %v763
        %v785 = vpack.c.b16 %v766, %v765
        %v786 = vpack.c.b16 %v768, %v767
        %v787 = vpack.c.b16 %v770, %v769
        %v788 = vpack.c.b16 %v772, %v771
        %v789 = vpack.c.b16 %v774, %v773
        %v790 = vpack.c.b16 %v776, %v775
        %v791 = vpack.c.b16 %v778, %v777
        %v792 = vpack.c.b16 %v780, %v779
        %vm805 = vcmask 523264
        %v807 = vsel %vm805, %v728, 0
        %v810 = vsel %vm805, %v730, 0
        %812 = vmatpush.bf16.msra.mxu0 %v788
        %813 = vmatpush.bf16.msra.mxu0 %v787
        %814 = vmatpush.bf16.msra.mxu0 %v786
        %815 = vmatpush.bf16.msra.mxu0 %v785
        %816 = vmatpush.bf16.msra.mxu0 %v784
        %817 = vmatpush.bf16.msra.mxu0 %v783
        %818 = vmatpush.bf16.msra.mxu0 %v782
        %819 = vmatpush.bf16.msra.mxu0 %v781
        %820 = vmatmul.bf16.gmra.mxu0 %v727
        %v821 = vpop.f32.mrf.mxu0
        %v822 = vadd.f32 %v713, %v821
        %v823 = vpop.f32.mrf.mxu0
        %v824 = vadd.f32 %v713, %v823
        %825 = vmatmul.bf16.gmra.mxu0 %v729
        %v826 = vpop.f32.mrf.mxu0
        %v827 = vadd.f32 %v713, %v826
        %v828 = vpop.f32.mrf.mxu0
        %v829 = vadd.f32 %v713, %v828
        %830 = vdwg.mxu0
        %831 = vmatpush.bf16.msra.mxu0 0
        %832 = vmatpush.bf16.msra.mxu0 0
        %833 = vmatpush.bf16.msra.mxu0 0
        %834 = vmatpush.bf16.msra.mxu0 0
        %835 = vmatpush.bf16.msra.mxu0 %v792
        %836 = vmatpush.bf16.msra.mxu0 %v791
        %837 = vmatpush.bf16.msra.mxu0 %v790
        %838 = vmatpush.bf16.msra.mxu0 %v789
        %839 = vmatmul.bf16.gmra.mxu0 %v807
        %v840 = vpop.f32.mrf.mxu0
        %v841 = vadd.f32 %v822, %v840
        %v842 = vpop.f32.mrf.mxu0
        %v843 = vadd.f32 %v824, %v842
        %844 = vmatmul.bf16.gmra.mxu0 %v810
        %v845 = vpop.f32.mrf.mxu0
        %v846 = vadd.f32 %v827, %v845
        %v847 = vpop.f32.mrf.mxu0
        %v848 = vadd.f32 %v829, %v847
        %849 = vdwg.mxu0
        %v850 = vld [vmem:[%s680] sm:$0xf]
        %v851 = vld [vmem:[%s680 + $0x4] sm:$0xf]
        %v852 = vld [vmem:[%s680 + $0x8] sm:$0xf]
        %v853 = vld [vmem:[%s680 + $0xc] sm:$0xf]
        %v854 = vunpack.c.l.bf16 %v850
        %v855 = vunpack.c.l.bf16 %v851
        %v856 = vunpack.c.l.bf16 %v852
        %v857 = vunpack.c.l.bf16 %v853
        %v858 = vadd.f32 %v841, %v854
        %v859 = vadd.f32 %v843, %v855
        %v860 = vadd.f32 %v846, %v856
        %v861 = vadd.f32 %v848, %v857
        %v866 = vrot.slane %v858, 4
        %v867 = vrot.slane %v859, 4
        %v868 = vrot.slane %v860, 4
        %v869 = vrot.slane %v861, 4
        %vm874 = vcmask 257024
        %875 = vst.msk [vmem:[#allocation2] sm:$0xf] %vm874, %v858
        %876 = vst.msk [vmem:[#allocation2 + $0x8] sm:$0xf] %vm874, %v866
        %877 = vst.msk [vmem:[#allocation2 + $0x10] sm:$0xf] %vm874, %v859
        %878 = vst.msk [vmem:[#allocation2 + $0x18] sm:$0xf] %vm874, %v867
        %879 = vst.msk [vmem:[#allocation2 + $0x20] sm:$0xf] %vm874, %v860
        %880 = vst.msk [vmem:[#allocation2 + $0x28] sm:$0xf] %vm874, %v868
        %881 = vst.msk [vmem:[#allocation2 + $0x30] sm:$0xf] %vm874, %v861
        %882 = vst.msk [vmem:[#allocation2 + $0x38] sm:$0xf] %vm874, %v869
        %v883 = vld [vmem:[%s2] sm:$0x1]
        %vm884 = vcmask 253952
        %885 = vst.msk [vmem:[#allocation2 + $0x4] sm:$0x1] %vm884, %v883
        %886 = vst.msk [vmem:[#allocation2 + $0xc] sm:$0x1] %vm884, %v883
        %887 = vst.msk [vmem:[#allocation2 + $0x14] sm:$0x1] %vm884, %v883
        %888 = vst.msk [vmem:[#allocation2 + $0x1c] sm:$0x1] %vm884, %v883
        %889 = vst.msk [vmem:[#allocation2 + $0x24] sm:$0x1] %vm884, %v883
        %890 = vst.msk [vmem:[#allocation2 + $0x2c] sm:$0x1] %vm884, %v883
        %891 = vst.msk [vmem:[#allocation2 + $0x34] sm:$0x1] %vm884, %v883
        %892 = vst.msk [vmem:[#allocation2 + $0x3c] sm:$0x1] %vm884, %v883
        %vm893 = vcmask 256000
        %894 = vst.msk [vmem:[#allocation2 + $0x5] sm:$0x7] %vm893, 0.0
        %895 = vst.msk [vmem:[#allocation2 + $0xd] sm:$0x7] %vm893, 0.0
        %896 = vst.msk [vmem:[#allocation2 + $0x15] sm:$0x7] %vm893, 0.0
        %897 = vst.msk [vmem:[#allocation2 + $0x1d] sm:$0x7] %vm893, 0.0
        %898 = vst.msk [vmem:[#allocation2 + $0x25] sm:$0x7] %vm893, 0.0
        %899 = vst.msk [vmem:[#allocation2 + $0x2d] sm:$0x7] %vm893, 0.0
        %900 = vst.msk [vmem:[#allocation2 + $0x35] sm:$0x7] %vm893, 0.0
        %901 = vst.msk [vmem:[#allocation2 + $0x3d] sm:$0x7] %vm893, 0.0
        %v902 = vld [vmem:[#allocation2] sm:$0xff]
        %v903 = vld [vmem:[#allocation2 + $0x8] sm:$0xff]
        %v904 = vld [vmem:[#allocation2 + $0x10] sm:$0xff]
        %v905 = vld [vmem:[#allocation2 + $0x18] sm:$0xff]
        %v906 = vld [vmem:[#allocation2 + $0x20] sm:$0xff]
        %v907 = vld [vmem:[#allocation2 + $0x28] sm:$0xff]
        %v908 = vld [vmem:[#allocation2 + $0x30] sm:$0xff]
        %v909 = vld [vmem:[#allocation2 + $0x38] sm:$0xff]
        %v910 = vld [vmem:[%s5] sm:$0xf]
        %v911 = vld [vmem:[%s5 + $0x4] sm:$0xf]
        %v912 = vld [vmem:[%s5 + $0x8] sm:$0xf]
        %v913 = vld [vmem:[%s5 + $0xc] sm:$0xf]
        %v914 = vpack.c.bf16 %v903, %v902
        %v915 = vpack.c.bf16 %v905, %v904
        %v916 = vpack.c.bf16 %v907, %v906
        %v917 = vpack.c.bf16 %v909, %v908
        %v918 = vld [vmem:[%s6] sm:$0x1]
        %v920 = vperm.slane %v918, 0
        %v926 = vunpack.c.l.b16 %v910
        %v927 = vunpack.c.l.b16 %v911
        %v928 = vunpack.c.l.b16 %v912
        %v929 = vunpack.c.l.b16 %v913
        %v930 = vpack.c.b16 %v927, %v926
        %v931 = vpack.c.b16 %v929, %v928
        %vm934 = vcmask 261120
        %v936 = vsel %vm934, %v914, 0
        %v939 = vsel %vm934, %v915, 0
        %v942 = vsel %vm934, %v916, 0
        %v945 = vsel %vm934, %v917, 0
        %947 = vmatpush.bf16.msra.mxu0 0
        %948 = vmatpush.bf16.msra.mxu0 0
        %949 = vmatpush.bf16.msra.mxu0 0
        %950 = vmatpush.bf16.msra.mxu0 0
        %951 = vmatpush.bf16.msra.mxu0 0
        %952 = vmatpush.bf16.msra.mxu0 0
        %953 = vmatpush.bf16.msra.mxu0 %v931
        %954 = vmatpush.bf16.msra.mxu0 %v930
        %955 = vmatmul.bf16.gmra.mxu0 %v936
        %v956 = vpop.f32.mrf.mxu0
        %v957 = vadd.f32 %v920, %v956
        %v958 = vpop.f32.mrf.mxu0
        %v959 = vadd.f32 %v920, %v958
        %960 = vmatmul.bf16.gmra.mxu0 %v939
        %v961 = vpop.f32.mrf.mxu0
        %v962 = vadd.f32 %v920, %v961
        %v963 = vpop.f32.mrf.mxu0
        %v964 = vadd.f32 %v920, %v963
        %965 = vmatmul.bf16.gmra.mxu0 %v942
        %v966 = vpop.f32.mrf.mxu0
        %v967 = vadd.f32 %v920, %v966
        %v968 = vpop.f32.mrf.mxu0
        %v969 = vadd.f32 %v920, %v968
        %970 = vmatmul.bf16.gmra.mxu0 %v945
        %v971 = vpop.f32.mrf.mxu0
        %v972 = vadd.f32 %v920, %v971
        %v973 = vpop.f32.mrf.mxu0
        %v974 = vadd.f32 %v920, %v973
        %975 = vdwg.mxu0
        %v976 = vpack.c.bf16 %v957, %v957
        %v977 = vpack.c.bf16 %v959, %v959
        %v978 = vpack.c.bf16 %v962, %v962
        %v979 = vpack.c.bf16 %v964, %v964
        %v980 = vpack.c.bf16 %v967, %v967
        %v981 = vpack.c.bf16 %v969, %v969
        %v982 = vpack.c.bf16 %v972, %v972
        %v983 = vpack.c.bf16 %v974, %v974
        %v985 = vunpack.c.l.b16 %v976
        %v986 = vpack.c.b16 %v985, %v985
        %987 = vrot.lane.b32.xlu0 %v986, 96
        %v988 = vpop.permute.xlu0 %987
        %v990 = vsel %vm934, %v976, 0
        %v993 = vsel %vm934, %v988, 0
        %995 = vmatpush.bf16.xpose.msra.mxu0 0
        %996 = vmatpush.bf16.xpose.msra.mxu0 0
        %997 = vmatpush.bf16.xpose.msra.mxu0 0
        %998 = vmatpush.bf16.xpose.msra.mxu0 0
        %999 = vmatpush.bf16.xpose.msra.mxu0 0
        %1000 = vmatpush.bf16.xpose.msra.mxu0 0
        %1001 = vmatpush.bf16.xpose.msra.mxu0 0
        %1002 = vmatpush.bf16.xpose.msra.mxu0 %v993
        %1003 = vmatmul.bf16.gmra.mxu0 %v990
        %v1004 = vpop.f32.mrf.mxu0
        %v1005 = vadd.f32 0.0, %v1004
        %v1006 = vpop.f32.mrf.mxu0
        %1007 = vdwg.mxu0
        %v1009 = vunpack.c.l.b16 %v977
        %v1010 = vpack.c.b16 %v1009, %v1009
        %1011 = vrot.lane.b32.xlu0 %v1010, 96
        %v1012 = vpop.permute.xlu0 %1011
        %v1014 = vsel %vm934, %v977, 0
        %v1017 = vsel %vm934, %v1012, 0
        %1019 = vmatpush.bf16.xpose.msra.mxu0 0
        %1020 = vmatpush.bf16.xpose.msra.mxu0 0
        %1021 = vmatpush.bf16.xpose.msra.mxu0 0
        %1022 = vmatpush.bf16.xpose.msra.mxu0 0
        %1023 = vmatpush.bf16.xpose.msra.mxu0 0
        %1024 = vmatpush.bf16.xpose.msra.mxu0 0
        %1025 = vmatpush.bf16.xpose.msra.mxu0 0
        %1026 = vmatpush.bf16.xpose.msra.mxu0 %v1017
        %1027 = vmatmul.bf16.gmra.mxu0 %v1014
        %v1028 = vpop.f32.mrf.mxu0
        %v1029 = vadd.f32 0.0, %v1028
        %v1030 = vpop.f32.mrf.mxu0
        %1031 = vdwg.mxu0
        %v1033 = vunpack.c.l.b16 %v978
        %v1034 = vpack.c.b16 %v1033, %v1033
        %1035 = vrot.lane.b32.xlu0 %v1034, 96
        %v1036 = vpop.permute.xlu0 %1035
        %v1038 = vsel %vm934, %v978, 0
        %v1041 = vsel %vm934, %v1036, 0
        %1043 = vmatpush.bf16.xpose.msra.mxu0 0
        %1044 = vmatpush.bf16.xpose.msra.mxu0 0
        %1045 = vmatpush.bf16.xpose.msra.mxu0 0
        %1046 = vmatpush.bf16.xpose.msra.mxu0 0
        %1047 = vmatpush.bf16.xpose.msra.mxu0 0
        %1048 = vmatpush.bf16.xpose.msra.mxu0 0
        %1049 = vmatpush.bf16.xpose.msra.mxu0 0
        %1050 = vmatpush.bf16.xpose.msra.mxu0 %v1041
        %1051 = vmatmul.bf16.gmra.mxu0 %v1038
        %v1052 = vpop.f32.mrf.mxu0
        %v1053 = vadd.f32 0.0, %v1052
        %v1054 = vpop.f32.mrf.mxu0
        %1055 = vdwg.mxu0
        %v1057 = vunpack.c.l.b16 %v979
        %v1058 = vpack.c.b16 %v1057, %v1057
        %1059 = vrot.lane.b32.xlu0 %v1058, 96
        %v1060 = vpop.permute.xlu0 %1059
        %v1062 = vsel %vm934, %v979, 0
        %v1065 = vsel %vm934, %v1060, 0
        %1067 = vmatpush.bf16.xpose.msra.mxu0 0
        %1068 = vmatpush.bf16.xpose.msra.mxu0 0
        %1069 = vmatpush.bf16.xpose.msra.mxu0 0
        %1070 = vmatpush.bf16.xpose.msra.mxu0 0
        %1071 = vmatpush.bf16.xpose.msra.mxu0 0
        %1072 = vmatpush.bf16.xpose.msra.mxu0 0
        %1073 = vmatpush.bf16.xpose.msra.mxu0 0
        %1074 = vmatpush.bf16.xpose.msra.mxu0 %v1065
        %1075 = vmatmul.bf16.gmra.mxu0 %v1062
        %v1076 = vpop.f32.mrf.mxu0
        %v1077 = vadd.f32 0.0, %v1076
        %v1078 = vpop.f32.mrf.mxu0
        %1079 = vdwg.mxu0
        %v1081 = vunpack.c.l.b16 %v980
        %v1082 = vpack.c.b16 %v1081, %v1081
        %1083 = vrot.lane.b32.xlu0 %v1082, 96
        %v1084 = vpop.permute.xlu0 %1083
        %v1086 = vsel %vm934, %v980, 0
        %v1089 = vsel %vm934, %v1084, 0
        %1091 = vmatpush.bf16.xpose.msra.mxu0 0
        %1092 = vmatpush.bf16.xpose.msra.mxu0 0
        %1093 = vmatpush.bf16.xpose.msra.mxu0 0
        %1094 = vmatpush.bf16.xpose.msra.mxu0 0
        %1095 = vmatpush.bf16.xpose.msra.mxu0 0
        %1096 = vmatpush.bf16.xpose.msra.mxu0 0
        %1097 = vmatpush.bf16.xpose.msra.mxu0 0
        %1098 = vmatpush.bf16.xpose.msra.mxu0 %v1089
        %1099 = vmatmul.bf16.gmra.mxu0 %v1086
        %v1100 = vpop.f32.mrf.mxu0
        %v1101 = vadd.f32 0.0, %v1100
        %v1102 = vpop.f32.mrf.mxu0
        %1103 = vdwg.mxu0
        %v1105 = vunpack.c.l.b16 %v981
        %v1106 = vpack.c.b16 %v1105, %v1105
        %1107 = vrot.lane.b32.xlu0 %v1106, 96
        %v1108 = vpop.permute.xlu0 %1107
        %v1110 = vsel %vm934, %v981, 0
        %v1113 = vsel %vm934, %v1108, 0
        %1115 = vmatpush.bf16.xpose.msra.mxu0 0
        %1116 = vmatpush.bf16.xpose.msra.mxu0 0
        %1117 = vmatpush.bf16.xpose.msra.mxu0 0
        %1118 = vmatpush.bf16.xpose.msra.mxu0 0
        %1119 = vmatpush.bf16.xpose.msra.mxu0 0
        %1120 = vmatpush.bf16.xpose.msra.mxu0 0
        %1121 = vmatpush.bf16.xpose.msra.mxu0 0
        %1122 = vmatpush.bf16.xpose.msra.mxu0 %v1113
        %1123 = vmatmul.bf16.gmra.mxu0 %v1110
        %v1124 = vpop.f32.mrf.mxu0
        %v1125 = vadd.f32 0.0, %v1124
        %v1126 = vpop.f32.mrf.mxu0
        %1127 = vdwg.mxu0
        %v1129 = vunpack.c.l.b16 %v982
        %v1130 = vpack.c.b16 %v1129, %v1129
        %1131 = vrot.lane.b32.xlu0 %v1130, 96
        %v1132 = vpop.permute.xlu0 %1131
        %v1134 = vsel %vm934, %v982, 0
        %v1137 = vsel %vm934, %v1132, 0
        %1139 = vmatpush.bf16.xpose.msra.mxu0 0
        %1140 = vmatpush.bf16.xpose.msra.mxu0 0
        %1141 = vmatpush.bf16.xpose.msra.mxu0 0
        %1142 = vmatpush.bf16.xpose.msra.mxu0 0
        %1143 = vmatpush.bf16.xpose.msra.mxu0 0
        %1144 = vmatpush.bf16.xpose.msra.mxu0 0
        %1145 = vmatpush.bf16.xpose.msra.mxu0 0
        %1146 = vmatpush.bf16.xpose.msra.mxu0 %v1137
        %1147 = vmatmul.bf16.gmra.mxu0 %v1134
        %v1148 = vpop.f32.mrf.mxu0
        %v1149 = vadd.f32 0.0, %v1148
        %v1150 = vpop.f32.mrf.mxu0
        %1151 = vdwg.mxu0
        %v1153 = vunpack.c.l.b16 %v983
        %v1154 = vpack.c.b16 %v1153, %v1153
        %1155 = vrot.lane.b32.xlu0 %v1154, 96
        %v1156 = vpop.permute.xlu0 %1155
        %v1158 = vsel %vm934, %v983, 0
        %v1161 = vsel %vm934, %v1156, 0
        %1163 = vmatpush.bf16.xpose.msra.mxu0 0
        %1164 = vmatpush.bf16.xpose.msra.mxu0 0
        %1165 = vmatpush.bf16.xpose.msra.mxu0 0
        %1166 = vmatpush.bf16.xpose.msra.mxu0 0
        %1167 = vmatpush.bf16.xpose.msra.mxu0 0
        %1168 = vmatpush.bf16.xpose.msra.mxu0 0
        %1169 = vmatpush.bf16.xpose.msra.mxu0 0
        %1170 = vmatpush.bf16.xpose.msra.mxu0 %v1161
        %1171 = vmatmul.bf16.gmra.mxu0 %v1158
        %v1172 = vpop.f32.mrf.mxu0
        %v1173 = vadd.f32 0.0, %v1172
        %v1174 = vpop.f32.mrf.mxu0
        %1175 = vdwg.mxu0
        %v1176 = vlaneseq
        %v1177 = vand.u32 %v1176, 127
        %vm1178 = vcmp.le.s32.totalorder %v1177, 4
        %v1179 = vsel %vm1178, 1, 0
        %vm1180 = vcmp.eq.s32.totalorder %v1179, 1
        %v1181 = vsel %vm1180, %v1005, -1e+30
        %v1182 = vsel %vm1180, %v1029, -1e+30
        %v1183 = vsel %vm1180, %v1053, -1e+30
        %v1184 = vsel %vm1180, %v1077, -1e+30
        %v1185 = vsel %vm1180, %v1101, -1e+30
        %v1186 = vsel %vm1180, %v1125, -1e+30
        %v1187 = vsel %vm1180, %v1149, -1e+30
        %v1188 = vsel %vm1180, %v1173, -1e+30
        %vm1189 = vcmask 64512
        %v1190 = vsel %vm1189, %v1181, -inf
        %1191 = vmax.xlane.f32.xlu0 %v1190
        %v1192 = vpop.xlane.xlu0 %1191
        %v1193 = vsel %vm1189, %v1182, -inf
        %1194 = vmax.xlane.f32.xlu0 %v1193
        %v1195 = vpop.xlane.xlu0 %1194
        %v1196 = vsel %vm1189, %v1183, -inf
        %1197 = vmax.xlane.f32.xlu0 %v1196
        %v1198 = vpop.xlane.xlu0 %1197
        %v1199 = vsel %vm1189, %v1184, -inf
        %1200 = vmax.xlane.f32.xlu0 %v1199
        %v1201 = vpop.xlane.xlu0 %1200
        %v1202 = vsel %vm1189, %v1185, -inf
        %1203 = vmax.xlane.f32.xlu0 %v1202
        %v1204 = vpop.xlane.xlu0 %1203
        %v1205 = vsel %vm1189, %v1186, -inf
        %1206 = vmax.xlane.f32.xlu0 %v1205
        %v1207 = vpop.xlane.xlu0 %1206
        %v1208 = vsel %vm1189, %v1187, -inf
        %1209 = vmax.xlane.f32.xlu0 %v1208
        %v1210 = vpop.xlane.xlu0 %1209
        %v1211 = vsel %vm1189, %v1188, -inf
        %1212 = vmax.xlane.f32.xlu0 %v1211
        %v1213 = vpop.xlane.xlu0 %1212
        %v1214 = vsub.f32 %v1181, %v1192
        %v1215 = vsub.f32 %v1182, %v1195
        %v1216 = vsub.f32 %v1183, %v1198
        %v1217 = vsub.f32 %v1184, %v1201
        %v1218 = vsub.f32 %v1185, %v1204
        %v1219 = vsub.f32 %v1186, %v1207
        %v1220 = vsub.f32 %v1187, %v1210
        %v1221 = vsub.f32 %v1188, %v1213
        %v1222 = vmul.f32 %v1214, 1.442695
        %v1223 = vpow.pop %v1222
        %v1224 = vmul.f32 %v1215, 1.442695
        %v1225 = vpow.pop %v1224
        %v1226 = vmul.f32 %v1216, 1.442695
        %v1227 = vpow.pop %v1226
        %v1228 = vmul.f32 %v1217, 1.442695
        %v1229 = vpow.pop %v1228
        %v1230 = vmul.f32 %v1218, 1.442695
        %v1231 = vpow.pop %v1230
        %v1232 = vmul.f32 %v1219, 1.442695
        %v1233 = vpow.pop %v1232
        %v1234 = vmul.f32 %v1220, 1.442695
        %v1235 = vpow.pop %v1234
        %v1236 = vmul.f32 %v1221, 1.442695
        %v1237 = vpow.pop %v1236
        %v1238 = vsel %vm1189, %v1223, 0.0
        %1239 = vadd.xlane.f32.xlu0 %v1238
        %v1240 = vpop.xlane.xlu0 %1239
        %v1241 = vsel %vm1189, %v1225, 0.0
        %1242 = vadd.xlane.f32.xlu0 %v1241
        %v1243 = vpop.xlane.xlu0 %1242
        %v1244 = vsel %vm1189, %v1227, 0.0
        %1245 = vadd.xlane.f32.xlu0 %v1244
        %v1246 = vpop.xlane.xlu0 %1245
        %v1247 = vsel %vm1189, %v1229, 0.0
        %1248 = vadd.xlane.f32.xlu0 %v1247
        %v1249 = vpop.xlane.xlu0 %1248
        %v1250 = vsel %vm1189, %v1231, 0.0
        %1251 = vadd.xlane.f32.xlu0 %v1250
        %v1252 = vpop.xlane.xlu0 %1251
        %v1253 = vsel %vm1189, %v1233, 0.0
        %1254 = vadd.xlane.f32.xlu0 %v1253
        %v1255 = vpop.xlane.xlu0 %1254
        %v1256 = vsel %vm1189, %v1235, 0.0
        %1257 = vadd.xlane.f32.xlu0 %v1256
        %v1258 = vpop.xlane.xlu0 %1257
        %v1259 = vsel %vm1189, %v1237, 0.0
        %1260 = vadd.xlane.f32.xlu0 %v1259
        %v1261 = vpop.xlane.xlu0 %1260
        %v1262 = vrcp.pop %v1240
        %v1263 = vrcp.pop %v1243
        %v1264 = vrcp.pop %v1246
        %v1265 = vrcp.pop %v1249
        %v1266 = vrcp.pop %v1252
        %v1267 = vrcp.pop %v1255
        %v1268 = vrcp.pop %v1258
        %v1269 = vrcp.pop %v1261
        %v1270 = vmul.f32 %v1223, %v1262
        %v1271 = vmul.f32 %v1225, %v1263
        %v1272 = vmul.f32 %v1227, %v1264
        %v1273 = vmul.f32 %v1229, %v1265
        %v1274 = vmul.f32 %v1231, %v1266
        %v1275 = vmul.f32 %v1233, %v1267
        %v1276 = vmul.f32 %v1235, %v1268
        %v1277 = vmul.f32 %v1237, %v1269
        %v1278 = vpack.c.bf16 %v1270, %v1270
        %v1279 = vpack.c.bf16 %v1271, %v1271
        %v1280 = vpack.c.bf16 %v1272, %v1272
        %v1281 = vpack.c.bf16 %v1273, %v1273
        %v1282 = vpack.c.bf16 %v1274, %v1274
        %v1283 = vpack.c.bf16 %v1275, %v1275
        %v1284 = vpack.c.bf16 %v1276, %v1276
        %v1285 = vpack.c.bf16 %v1277, %v1277
        %1286 = vrot.lane.b32.xlu0 %v986, 64
        %v1287 = vpop.permute.xlu0 %1286
        %v1289 = vsel %vm1189, %v1278, 0
        %vm1291 = vcmask 1043456
        %v1293 = vsel %vm1291, %v1287, 0
        %1295 = vmatpush.bf16.msra.mxu0 0
        %1296 = vmatpush.bf16.msra.mxu0 0
        %1297 = vmatpush.bf16.msra.mxu0 0
        %1298 = vmatpush.bf16.msra.mxu0 0
        %1299 = vmatpush.bf16.msra.mxu0 0
        %1300 = vmatpush.bf16.msra.mxu0 0
        %1301 = vmatpush.bf16.msra.mxu0 0
        %1302 = vmatpush.bf16.msra.mxu0 %v1293
        %1303 = vmatmul.bf16.gmra.mxu0 %v1289
        %v1304 = vpop.f32.mrf.mxu0
        %v1305 = vadd.f32 0.0, %v1304
        %v1306 = vpop.f32.mrf.mxu0
        %1307 = vdwg.mxu0
        %1308 = vrot.lane.b32.xlu0 %v1010, 64
        %v1309 = vpop.permute.xlu0 %1308
        %v1311 = vsel %vm1189, %v1279, 0
        %v1314 = vsel %vm1291, %v1309, 0
        %1316 = vmatpush.bf16.msra.mxu0 0
        %1317 = vmatpush.bf16.msra.mxu0 0
        %1318 = vmatpush.bf16.msra.mxu0 0
        %1319 = vmatpush.bf16.msra.mxu0 0
        %1320 = vmatpush.bf16.msra.mxu0 0
        %1321 = vmatpush.bf16.msra.mxu0 0
        %1322 = vmatpush.bf16.msra.mxu0 0
        %1323 = vmatpush.bf16.msra.mxu0 %v1314
        %1324 = vmatmul.bf16.gmra.mxu0 %v1311
        %v1325 = vpop.f32.mrf.mxu0
        %v1326 = vadd.f32 0.0, %v1325
        %v1327 = vpop.f32.mrf.mxu0
        %1328 = vdwg.mxu0
        %1329 = vrot.lane.b32.xlu0 %v1034, 64
        %v1330 = vpop.permute.xlu0 %1329
        %v1332 = vsel %vm1189, %v1280, 0
        %v1335 = vsel %vm1291, %v1330, 0
        %1337 = vmatpush.bf16.msra.mxu0 0
        %1338 = vmatpush.bf16.msra.mxu0 0
        %1339 = vmatpush.bf16.msra.mxu0 0
        %1340 = vmatpush.bf16.msra.mxu0 0
        %1341 = vmatpush.bf16.msra.mxu0 0
        %1342 = vmatpush.bf16.msra.mxu0 0
        %1343 = vmatpush.bf16.msra.mxu0 0
        %1344 = vmatpush.bf16.msra.mxu0 %v1335
        %1345 = vmatmul.bf16.gmra.mxu0 %v1332
        %v1346 = vpop.f32.mrf.mxu0
        %v1347 = vadd.f32 0.0, %v1346
        %v1348 = vpop.f32.mrf.mxu0
        %1349 = vdwg.mxu0
        %1350 = vrot.lane.b32.xlu0 %v1058, 64
        %v1351 = vpop.permute.xlu0 %1350
        %v1353 = vsel %vm1189, %v1281, 0
        %v1356 = vsel %vm1291, %v1351, 0
        %1358 = vmatpush.bf16.msra.mxu0 0
        %1359 = vmatpush.bf16.msra.mxu0 0
        %1360 = vmatpush.bf16.msra.mxu0 0
        %1361 = vmatpush.bf16.msra.mxu0 0
        %1362 = vmatpush.bf16.msra.mxu0 0
        %1363 = vmatpush.bf16.msra.mxu0 0
        %1364 = vmatpush.bf16.msra.mxu0 0
        %1365 = vmatpush.bf16.msra.mxu0 %v1356
        %1366 = vmatmul.bf16.gmra.mxu0 %v1353
        %v1367 = vpop.f32.mrf.mxu0
        %v1368 = vadd.f32 0.0, %v1367
        %v1369 = vpop.f32.mrf.mxu0
        %1370 = vdwg.mxu0
        %1371 = vrot.lane.b32.xlu0 %v1082, 64
        %v1372 = vpop.permute.xlu0 %1371
        %v1374 = vsel %vm1189, %v1282, 0
        %v1377 = vsel %vm1291, %v1372, 0
        %1379 = vmatpush.bf16.msra.mxu0 0
        %1380 = vmatpush.bf16.msra.mxu0 0
        %1381 = vmatpush.bf16.msra.mxu0 0
        %1382 = vmatpush.bf16.msra.mxu0 0
        %1383 = vmatpush.bf16.msra.mxu0 0
        %1384 = vmatpush.bf16.msra.mxu0 0
        %1385 = vmatpush.bf16.msra.mxu0 0
        %1386 = vmatpush.bf16.msra.mxu0 %v1377
        %1387 = vmatmul.bf16.gmra.mxu0 %v1374
        %v1388 = vpop.f32.mrf.mxu0
        %v1389 = vadd.f32 0.0, %v1388
        %v1390 = vpop.f32.mrf.mxu0
        %1391 = vdwg.mxu0
        %1392 = vrot.lane.b32.xlu0 %v1106, 64
        %v1393 = vpop.permute.xlu0 %1392
        %v1395 = vsel %vm1189, %v1283, 0
        %v1398 = vsel %vm1291, %v1393, 0
        %1400 = vmatpush.bf16.msra.mxu0 0
        %1401 = vmatpush.bf16.msra.mxu0 0
        %1402 = vmatpush.bf16.msra.mxu0 0
        %1403 = vmatpush.bf16.msra.mxu0 0
        %1404 = vmatpush.bf16.msra.mxu0 0
        %1405 = vmatpush.bf16.msra.mxu0 0
        %1406 = vmatpush.bf16.msra.mxu0 0
        %1407 = vmatpush.bf16.msra.mxu0 %v1398
        %1408 = vmatmul.bf16.gmra.mxu0 %v1395
        %v1409 = vpop.f32.mrf.mxu0
        %v1410 = vadd.f32 0.0, %v1409
        %v1411 = vpop.f32.mrf.mxu0
        %1412 = vdwg.mxu0
        %1413 = vrot.lane.b32.xlu0 %v1130, 64
        %v1414 = vpop.permute.xlu0 %1413
        %v1416 = vsel %vm1189, %v1284, 0
        %v1419 = vsel %vm1291, %v1414, 0
        %1421 = vmatpush.bf16.msra.mxu0 0
        %1422 = vmatpush.bf16.msra.mxu0 0
        %1423 = vmatpush.bf16.msra.mxu0 0
        %1424 = vmatpush.bf16.msra.mxu0 0
        %1425 = vmatpush.bf16.msra.mxu0 0
        %1426 = vmatpush.bf16.msra.mxu0 0
        %1427 = vmatpush.bf16.msra.mxu0 0
        %1428 = vmatpush.bf16.msra.mxu0 %v1419
        %1429 = vmatmul.bf16.gmra.mxu0 %v1416
        %v1430 = vpop.f32.mrf.mxu0
        %v1431 = vadd.f32 0.0, %v1430
        %v1432 = vpop.f32.mrf.mxu0
        %1433 = vdwg.mxu0
        %1434 = vrot.lane.b32.xlu0 %v1154, 64
        %v1435 = vpop.permute.xlu0 %1434
        %v1437 = vsel %vm1189, %v1285, 0
        %v1440 = vsel %vm1291, %v1435, 0
        %1442 = vmatpush.bf16.msra.mxu0 0
        %1443 = vmatpush.bf16.msra.mxu0 0
        %1444 = vmatpush.bf16.msra.mxu0 0
        %1445 = vmatpush.bf16.msra.mxu0 0
        %1446 = vmatpush.bf16.msra.mxu0 0
        %1447 = vmatpush.bf16.msra.mxu0 0
        %1448 = vmatpush.bf16.msra.mxu0 0
        %1449 = vmatpush.bf16.msra.mxu0 %v1440
        %1450 = vmatmul.bf16.gmra.mxu0 %v1437
        %v1451 = vpop.f32.mrf.mxu0
        %v1452 = vadd.f32 0.0, %v1451
        %v1453 = vpop.f32.mrf.mxu0
        %1454 = vdwg.mxu0
        %v1455 = vld [vmem:[%s7] sm:$0xf]
        %v1456 = vld [vmem:[%s7 + $0x4] sm:$0xf]
        %v1457 = vld [vmem:[%s7 + $0x8] sm:$0xf]
        %v1458 = vld [vmem:[%s7 + $0xc] sm:$0xf]
        %v1459 = vpack.c.bf16 %v1326, %v1305
        %v1460 = vpack.c.bf16 %v1368, %v1347
        %v1461 = vpack.c.bf16 %v1410, %v1389
        %v1462 = vpack.c.bf16 %v1452, %v1431
        %v1467 = vunpack.c.l.b16 %v1455
        %v1468 = vunpack.c.l.b16 %v1456
        %v1469 = vunpack.c.l.b16 %v1457
        %v1470 = vunpack.c.l.b16 %v1458
        %v1471 = vpack.c.b16 %v1468, %v1467
        %v1472 = vpack.c.b16 %v1470, %v1469
        %v1476 = vsel %vm934, %v1459, 0
        %v1479 = vsel %vm934, %v1460, 0
        %v1482 = vsel %vm934, %v1461, 0
        %v1485 = vsel %vm934, %v1462, 0
        %1487 = vmatpush.bf16.msra.mxu0 0
        %1488 = vmatpush.bf16.msra.mxu0 0
        %1489 = vmatpush.bf16.msra.mxu0 0
        %1490 = vmatpush.bf16.msra.mxu0 0
        %1491 = vmatpush.bf16.msra.mxu0 0
        %1492 = vmatpush.bf16.msra.mxu0 0
        %1493 = vmatpush.bf16.msra.mxu0 %v1472
        %1494 = vmatpush.bf16.msra.mxu0 %v1471
        %1495 = vmatmul.bf16.gmra.mxu0 %v1476
        %v1496 = vpop.f32.mrf.mxu0
        %v1497 = vadd.f32 0.0, %v1496
        %v1498 = vpop.f32.mrf.mxu0
        %v1499 = vadd.f32 0.0, %v1498
        %1500 = vmatmul.bf16.gmra.mxu0 %v1479
        %v1501 = vpop.f32.mrf.mxu0
        %v1502 = vadd.f32 0.0, %v1501
        %v1503 = vpop.f32.mrf.mxu0
        %v1504 = vadd.f32 0.0, %v1503
        %1505 = vmatmul.bf16.gmra.mxu0 %v1482
        %v1506 = vpop.f32.mrf.mxu0
        %v1507 = vadd.f32 0.0, %v1506
        %v1508 = vpop.f32.mrf.mxu0
        %v1509 = vadd.f32 0.0, %v1508
        %1510 = vmatmul.bf16.gmra.mxu0 %v1485
        %v1511 = vpop.f32.mrf.mxu0
        %v1512 = vadd.f32 0.0, %v1511
        %v1513 = vpop.f32.mrf.mxu0
        %v1514 = vadd.f32 0.0, %v1513
        %1515 = vdwg.mxu0
        %v1516 = vadd.f32 %v902, %v1497
        %v1517 = vadd.f32 %v903, %v1499
        %v1518 = vadd.f32 %v904, %v1502
        %v1519 = vadd.f32 %v905, %v1504
        %v1520 = vadd.f32 %v906, %v1507
        %v1521 = vadd.f32 %v907, %v1509
        %v1522 = vadd.f32 %v908, %v1512
        %v1523 = vadd.f32 %v909, %v1514
        %v1524 = vld [vmem:[%s8] sm:$0x1]
        %v1526 = vperm.slane %v1524, 0
        %v1528 = vadd.f32 %v1516, %v1526
        %v1529 = vadd.f32 %v1517, %v1526
        %v1530 = vadd.f32 %v1518, %v1526
        %v1531 = vadd.f32 %v1519, %v1526
        %v1532 = vadd.f32 %v1520, %v1526
        %v1533 = vadd.f32 %v1521, %v1526
        %v1534 = vadd.f32 %v1522, %v1526
        %v1535 = vadd.f32 %v1523, %v1526
        %v1536 = vld [vmem:[%s9] sm:$0x1]
        %v1537 = vld [vmem:[%s10] sm:$0x1]
        %v1538 = vsel %vm934, %v1528, 0.0
        %1539 = vadd.xlane.f32.xlu0 %v1538
        %v1540 = vpop.xlane.xlu0 %1539
        %v1541 = vsel %vm934, %v1529, 0.0
        %1542 = vadd.xlane.f32.xlu0 %v1541
        %v1543 = vpop.xlane.xlu0 %1542
        %v1544 = vsel %vm934, %v1530, 0.0
        %1545 = vadd.xlane.f32.xlu0 %v1544
        %v1546 = vpop.xlane.xlu0 %1545
        %v1547 = vsel %vm934, %v1531, 0.0
        %1548 = vadd.xlane.f32.xlu0 %v1547
        %v1549 = vpop.xlane.xlu0 %1548
        %v1550 = vsel %vm934, %v1532, 0.0
        %1551 = vadd.xlane.f32.xlu0 %v1550
        %v1552 = vpop.xlane.xlu0 %1551
        %v1553 = vsel %vm934, %v1533, 0.0
        %1554 = vadd.xlane.f32.xlu0 %v1553
        %v1555 = vpop.xlane.xlu0 %1554
        %v1556 = vsel %vm934, %v1534, 0.0
        %1557 = vadd.xlane.f32.xlu0 %v1556
        %v1558 = vpop.xlane.xlu0 %1557
        %v1559 = vsel %vm934, %v1535, 0.0
        %1560 = vadd.xlane.f32.xlu0 %v1559
        %v1561 = vpop.xlane.xlu0 %1560
        %v1562 = vrcp.pop 32.0
        %v1563 = vmul.f32 32.0, %v1562
        %v1564 = vsub.f32 1.0, %v1563
        %v1565 = vmul.f32 %v1562, %v1564
        %v1566 = vadd.f32 %v1562, %v1565
        %vm1567 = vweird.f32 %v1562
        %v1568 = vsel %vm1567, %v1562, %v1566
        %v1569 = vmul.f32 %v1540, %v1568
        %v1570 = vmul.f32 %v1543, %v1568
        %v1571 = vmul.f32 %v1546, %v1568
        %v1572 = vmul.f32 %v1549, %v1568
        %v1573 = vmul.f32 %v1552, %v1568
        %v1574 = vmul.f32 %v1555, %v1568
        %v1575 = vmul.f32 %v1558, %v1568
        %v1576 = vmul.f32 %v1561, %v1568
        %v1577 = vsub.f32 %v1528, %v1569
        %v1578 = vsub.f32 %v1529, %v1570
        %v1579 = vsub.f32 %v1530, %v1571
        %v1580 = vsub.f32 %v1531, %v1572
        %v1581 = vsub.f32 %v1532, %v1573
        %v1582 = vsub.f32 %v1533, %v1574
        %v1583 = vsub.f32 %v1534, %v1575
        %v1584 = vsub.f32 %v1535, %v1576
        %v1585 = vmul.f32 %v1577, %v1577
        %v1586 = vmul.f32 %v1578, %v1578
        %v1587 = vmul.f32 %v1579, %v1579
        %v1588 = vmul.f32 %v1580, %v1580
        %v1589 = vmul.f32 %v1581, %v1581
        %v1590 = vmul.f32 %v1582, %v1582
        %v1591 = vmul.f32 %v1583, %v1583
        %v1592 = vmul.f32 %v1584, %v1584
        %v1593 = vsel %vm934, %v1585, 0.0
        %1594 = vadd.xlane.f32.xlu0 %v1593
        %v1595 = vpop.xlane.xlu0 %1594
        %v1596 = vsel %vm934, %v1586, 0.0
        %1597 = vadd.xlane.f32.xlu0 %v1596
        %v1598 = vpop.xlane.xlu0 %1597
        %v1599 = vsel %vm934, %v1587, 0.0
        %1600 = vadd.xlane.f32.xlu0 %v1599
        %v1601 = vpop.xlane.xlu0 %1600
        %v1602 = vsel %vm934, %v1588, 0.0
        %1603 = vadd.xlane.f32.xlu0 %v1602
        %v1604 = vpop.xlane.xlu0 %1603
        %v1605 = vsel %vm934, %v1589, 0.0
        %1606 = vadd.xlane.f32.xlu0 %v1605
        %v1607 = vpop.xlane.xlu0 %1606
        %v1608 = vsel %vm934, %v1590, 0.0
        %1609 = vadd.xlane.f32.xlu0 %v1608
        %v1610 = vpop.xlane.xlu0 %1609
        %v1611 = vsel %vm934, %v1591, 0.0
        %1612 = vadd.xlane.f32.xlu0 %v1611
        %v1613 = vpop.xlane.xlu0 %1612
        %v1614 = vsel %vm934, %v1592, 0.0
        %1615 = vadd.xlane.f32.xlu0 %v1614
        %v1616 = vpop.xlane.xlu0 %1615
        %v1617 = vmul.f32 %v1595, %v1568
        %v1618 = vmul.f32 %v1598, %v1568
        %v1619 = vmul.f32 %v1601, %v1568
        %v1620 = vmul.f32 %v1604, %v1568
        %v1621 = vmul.f32 %v1607, %v1568
        %v1622 = vmul.f32 %v1610, %v1568
        %v1623 = vmul.f32 %v1613, %v1568
        %v1624 = vmul.f32 %v1616, %v1568
        %v1625 = vadd.f32 %v1617, 1e-05
        %v1626 = vadd.f32 %v1618, 1e-05
        %v1627 = vadd.f32 %v1619, 1e-05
        %v1628 = vadd.f32 %v1620, 1e-05
        %v1629 = vadd.f32 %v1621, 1e-05
        %v1630 = vadd.f32 %v1622, 1e-05
        %v1631 = vadd.f32 %v1623, 1e-05
        %v1632 = vadd.f32 %v1624, 1e-05
        %v1633 = vrsqrt.pop %v1625
        %v1634 = vmul.f32 %v1633, %v1625
        %v1635 = vmul.f32 %v1634, %v1633
        %v1636 = vmul.f32 0.5, %v1635
        %v1637 = vsub.f32 1.5, %v1636
        %v1638 = vmul.f32 %v1633, %v1637
        %vm1639 = vweird.f32 %v1625
        %vm1640 = vweird.f32 %v1633
        %vm1641 = vmor %vm1639, %vm1640
        %v1642 = vsel %vm1641, %v1633, %v1638
        %v1643 = vrsqrt.pop %v1626
        %v1644 = vmul.f32 %v1643, %v1626
        %v1645 = vmul.f32 %v1644, %v1643
        %v1646 = vmul.f32 0.5, %v1645
        %v1647 = vsub.f32 1.5, %v1646
        %v1648 = vmul.f32 %v1643, %v1647
        %vm1649 = vweird.f32 %v1626
        %vm1650 = vweird.f32 %v1643
        %vm1651 = vmor %vm1649, %vm1650
        %v1652 = vsel %vm1651, %v1643, %v1648
        %v1653 = vrsqrt.pop %v1627
        %v1654 = vmul.f32 %v1653, %v1627
        %v1655 = vmul.f32 %v1654, %v1653
        %v1656 = vmul.f32 0.5, %v1655
        %v1657 = vsub.f32 1.5, %v1656
        %v1658 = vmul.f32 %v1653, %v1657
        %vm1659 = vweird.f32 %v1627
        %vm1660 = vweird.f32 %v1653
        %vm1661 = vmor %vm1659, %vm1660
        %v1662 = vsel %vm1661, %v1653, %v1658
        %v1663 = vrsqrt.pop %v1628
        %v1664 = vmul.f32 %v1663, %v1628
        %v1665 = vmul.f32 %v1664, %v1663
        %v1666 = vmul.f32 0.5, %v1665
        %v1667 = vsub.f32 1.5, %v1666
        %v1668 = vmul.f32 %v1663, %v1667
        %vm1669 = vweird.f32 %v1628
        %vm1670 = vweird.f32 %v1663
        %vm1671 = vmor %vm1669, %vm1670
        %v1672 = vsel %vm1671, %v1663, %v1668
        %v1673 = vrsqrt.pop %v1629
        %v1674 = vmul.f32 %v1673, %v1629
        %v1675 = vmul.f32 %v1674, %v1673
        %v1676 = vmul.f32 0.5, %v1675
        %v1677 = vsub.f32 1.5, %v1676
        %v1678 = vmul.f32 %v1673, %v1677
        %vm1679 = vweird.f32 %v1629
        %vm1680 = vweird.f32 %v1673
        %vm1681 = vmor %vm1679, %vm1680
        %v1682 = vsel %vm1681, %v1673, %v1678
        %v1683 = vrsqrt.pop %v1630
        %v1684 = vmul.f32 %v1683, %v1630
        %v1685 = vmul.f32 %v1684, %v1683
        %v1686 = vmul.f32 0.5, %v1685
        %v1687 = vsub.f32 1.5, %v1686
        %v1688 = vmul.f32 %v1683, %v1687
        %vm1689 = vweird.f32 %v1630
        %vm1690 = vweird.f32 %v1683
        %vm1691 = vmor %vm1689, %vm1690
        %v1692 = vsel %vm1691, %v1683, %v1688
        %v1693 = vrsqrt.pop %v1631
        %v1694 = vmul.f32 %v1693, %v1631
        %v1695 = vmul.f32 %v1694, %v1693
        %v1696 = vmul.f32 0.5, %v1695
        %v1697 = vsub.f32 1.5, %v1696
        %v1698 = vmul.f32 %v1693, %v1697
        %vm1699 = vweird.f32 %v1631
        %vm1700 = vweird.f32 %v1693
        %vm1701 = vmor %vm1699, %vm1700
        %v1702 = vsel %vm1701, %v1693, %v1698
        %v1703 = vrsqrt.pop %v1632
        %v1704 = vmul.f32 %v1703, %v1632
        %v1705 = vmul.f32 %v1704, %v1703
        %v1706 = vmul.f32 0.5, %v1705
        %v1707 = vsub.f32 1.5, %v1706
        %v1708 = vmul.f32 %v1703, %v1707
        %vm1709 = vweird.f32 %v1632
        %vm1710 = vweird.f32 %v1703
        %vm1711 = vmor %vm1709, %vm1710
        %v1712 = vsel %vm1711, %v1703, %v1708
        %v1713 = vmul.f32 %v1577, %v1642
        %v1714 = vmul.f32 %v1578, %v1652
        %v1715 = vmul.f32 %v1579, %v1662
        %v1716 = vmul.f32 %v1580, %v1672
        %v1717 = vmul.f32 %v1581, %v1682
        %v1718 = vmul.f32 %v1582, %v1692
        %v1719 = vmul.f32 %v1583, %v1702
        %v1720 = vmul.f32 %v1584, %v1712
        %v1722 = vperm.slane %v1536, 0
        %v1724 = vmul.f32 %v1713, %v1722
        %v1725 = vmul.f32 %v1714, %v1722
        %v1726 = vmul.f32 %v1715, %v1722
        %v1727 = vmul.f32 %v1716, %v1722
        %v1728 = vmul.f32 %v1717, %v1722
        %v1729 = vmul.f32 %v1718, %v1722
        %v1730 = vmul.f32 %v1719, %v1722
        %v1731 = vmul.f32 %v1720, %v1722
        %v1733 = vperm.slane %v1537, 0
        %v1735 = vadd.f32 %v1724, %v1733
        %v1736 = vadd.f32 %v1725, %v1733
        %v1737 = vadd.f32 %v1726, %v1733
        %v1738 = vadd.f32 %v1727, %v1733
        %v1739 = vadd.f32 %v1728, %v1733
        %v1740 = vadd.f32 %v1729, %v1733
        %v1741 = vadd.f32 %v1730, %v1733
        %v1742 = vadd.f32 %v1731, %v1733
        %v1743 = vld [vmem:[%s11] sm:$0xf]
        %v1744 = vld [vmem:[%s11 + $0x4] sm:$0xf]
        %v1745 = vld [vmem:[%s11 + $0x8] sm:$0xf]
        %v1746 = vld [vmem:[%s11 + $0xc] sm:$0xf]
        %v1747 = vpack.c.bf16 %v1736, %v1735
        %v1748 = vpack.c.bf16 %v1738, %v1737
        %v1749 = vpack.c.bf16 %v1740, %v1739
        %v1750 = vpack.c.bf16 %v1742, %v1741
        %v1751 = vld [vmem:[%s12] sm:$0x1]
        %v1753 = vperm.slane %v1751, 0
        %v1759 = vunpack.c.l.b16 %v1743
        %v1760 = vunpack.c.l.b16 %v1744
        %v1761 = vunpack.c.l.b16 %v1745
        %v1762 = vunpack.c.l.b16 %v1746
        %v1763 = vpack.c.b16 %v1760, %v1759
        %v1764 = vpack.c.b16 %v1762, %v1761
        %v1768 = vsel %vm934, %v1747, 0
        %v1771 = vsel %vm934, %v1748, 0
        %v1774 = vsel %vm934, %v1749, 0
        %v1777 = vsel %vm934, %v1750, 0
        %1779 = vmatpush.bf16.msra.mxu0 0
        %1780 = vmatpush.bf16.msra.mxu0 0
        %1781 = vmatpush.bf16.msra.mxu0 0
        %1782 = vmatpush.bf16.msra.mxu0 0
        %1783 = vmatpush.bf16.msra.mxu0 0
        %1784 = vmatpush.bf16.msra.mxu0 0
        %1785 = vmatpush.bf16.msra.mxu0 %v1764
        %1786 = vmatpush.bf16.msra.mxu0 %v1763
        %1787 = vmatmul.bf16.gmra.mxu0 %v1768
        %v1788 = vpop.f32.mrf.mxu0
        %v1789 = vadd.f32 %v1753, %v1788
        %v1790 = vpop.f32.mrf.mxu0
        %v1791 = vadd.f32 %v1753, %v1790
        %1792 = vmatmul.bf16.gmra.mxu0 %v1771
        %v1793 = vpop.f32.mrf.mxu0
        %v1794 = vadd.f32 %v1753, %v1793
        %v1795 = vpop.f32.mrf.mxu0
        %v1796 = vadd.f32 %v1753, %v1795
        %1797 = vmatmul.bf16.gmra.mxu0 %v1774
        %v1798 = vpop.f32.mrf.mxu0
        %v1799 = vadd.f32 %v1753, %v1798
        %v1800 = vpop.f32.mrf.mxu0
        %v1801 = vadd.f32 %v1753, %v1800
        %1802 = vmatmul.bf16.gmra.mxu0 %v1777
        %v1803 = vpop.f32.mrf.mxu0
        %v1804 = vadd.f32 %v1753, %v1803
        %v1805 = vpop.f32.mrf.mxu0
        %v1806 = vadd.f32 %v1753, %v1805
        %1807 = vdwg.mxu0
        %v1808 = vmax.f32 %v1789, 0.0
        %v1809 = vmax.f32 %v1791, 0.0
        %v1810 = vmax.f32 %v1794, 0.0
        %v1811 = vmax.f32 %v1796, 0.0
        %v1812 = vmax.f32 %v1799, 0.0
        %v1813 = vmax.f32 %v1801, 0.0
        %v1814 = vmax.f32 %v1804, 0.0
        %v1815 = vmax.f32 %v1806, 0.0
        %v1816 = vld [vmem:[%s13] sm:$0xf]
        %v1817 = vld [vmem:[%s13 + $0x4] sm:$0xf]
        %v1818 = vld [vmem:[%s13 + $0x8] sm:$0xf]
        %v1819 = vld [vmem:[%s13 + $0xc] sm:$0xf]
        %v1820 = vld [vmem:[%s13 + $0x10] sm:$0xf]
        %v1821 = vld [vmem:[%s13 + $0x14] sm:$0xf]
        %v1822 = vld [vmem:[%s13 + $0x18] sm:$0xf]
        %v1823 = vld [vmem:[%s13 + $0x1c] sm:$0xf]
        %v1824 = vpack.c.bf16 %v1809, %v1808
        %v1825 = vpack.c.bf16 %v1811, %v1810
        %v1826 = vpack.c.bf16 %v1813, %v1812
        %v1827 = vpack.c.bf16 %v1815, %v1814
        %v1836 = vunpack.c.l.b16 %v1816
        %v1837 = vunpack.c.l.b16 %v1817
        %v1838 = vunpack.c.l.b16 %v1818
        %v1839 = vunpack.c.l.b16 %v1819
        %v1840 = vunpack.c.l.b16 %v1820
        %v1841 = vunpack.c.l.b16 %v1821
        %v1842 = vunpack.c.l.b16 %v1822
        %v1843 = vunpack.c.l.b16 %v1823
        %v1844 = vpack.c.b16 %v1837, %v1836
        %v1845 = vpack.c.b16 %v1839, %v1838
        %v1846 = vpack.c.b16 %v1841, %v1840
        %v1847 = vpack.c.b16 %v1843, %v1842
        %v1853 = vsel %vm805, %v1824, 0
        %v1856 = vsel %vm805, %v1825, 0
        %v1859 = vsel %vm805, %v1826, 0
        %v1862 = vsel %vm805, %v1827, 0
        %1864 = vmatpush.bf16.msra.mxu0 0
        %1865 = vmatpush.bf16.msra.mxu0 0
        %1866 = vmatpush.bf16.msra.mxu0 0
        %1867 = vmatpush.bf16.msra.mxu0 0
        %1868 = vmatpush.bf16.msra.mxu0 %v1847
        %1869 = vmatpush.bf16.msra.mxu0 %v1846
        %1870 = vmatpush.bf16.msra.mxu0 %v1845
        %1871 = vmatpush.bf16.msra.mxu0 %v1844
        %1872 = vmatmul.bf16.gmra.mxu0 %v1853
        %v1873 = vpop.f32.mrf.mxu0
        %v1874 = vadd.f32 0.0, %v1873
        %v1875 = vpop.f32.mrf.mxu0
        %v1876 = vadd.f32 0.0, %v1875
        %1877 = vmatmul.bf16.gmra.mxu0 %v1856
        %v1878 = vpop.f32.mrf.mxu0
        %v1879 = vadd.f32 0.0, %v1878
        %v1880 = vpop.f32.mrf.mxu0
        %v1881 = vadd.f32 0.0, %v1880
        %1882 = vmatmul.bf16.gmra.mxu0 %v1859
        %v1883 = vpop.f32.mrf.mxu0
        %v1884 = vadd.f32 0.0, %v1883
        %v1885 = vpop.f32.mrf.mxu0
        %v1886 = vadd.f32 0.0, %v1885
        %1887 = vmatmul.bf16.gmra.mxu0 %v1862
        %v1888 = vpop.f32.mrf.mxu0
        %v1889 = vadd.f32 0.0, %v1888
        %v1890 = vpop.f32.mrf.mxu0
        %v1891 = vadd.f32 0.0, %v1890
        %1892 = vdwg.mxu0
        %v1893 = vadd.f32 %v1735, %v1874
        %v1894 = vadd.f32 %v1736, %v1876
        %v1895 = vadd.f32 %v1737, %v1879
        %v1896 = vadd.f32 %v1738, %v1881
        %v1897 = vadd.f32 %v1739, %v1884
        %v1898 = vadd.f32 %v1740, %v1886
        %v1899 = vadd.f32 %v1741, %v1889
        %v1900 = vadd.f32 %v1742, %v1891
        %v1901 = vld [vmem:[%s14] sm:$0x1]
        %v1903 = vperm.slane %v1901, 0
        %v1905 = vadd.f32 %v1893, %v1903
        %v1906 = vadd.f32 %v1894, %v1903
        %v1907 = vadd.f32 %v1895, %v1903
        %v1908 = vadd.f32 %v1896, %v1903
        %v1909 = vadd.f32 %v1897, %v1903
        %v1910 = vadd.f32 %v1898, %v1903
        %v1911 = vadd.f32 %v1899, %v1903
        %v1912 = vadd.f32 %v1900, %v1903
        %v1913 = vld [vmem:[%s15] sm:$0x1]
        %v1914 = vld [vmem:[%s16] sm:$0x1]
        %v1915 = vsel %vm934, %v1905, 0.0
        %1916 = vadd.xlane.f32.xlu0 %v1915
        %v1917 = vpop.xlane.xlu0 %1916
        %v1918 = vsel %vm934, %v1906, 0.0
        %1919 = vadd.xlane.f32.xlu0 %v1918
        %v1920 = vpop.xlane.xlu0 %1919
        %v1921 = vsel %vm934, %v1907, 0.0
        %1922 = vadd.xlane.f32.xlu0 %v1921
        %v1923 = vpop.xlane.xlu0 %1922
        %v1924 = vsel %vm934, %v1908, 0.0
        %1925 = vadd.xlane.f32.xlu0 %v1924
        %v1926 = vpop.xlane.xlu0 %1925
        %v1927 = vsel %vm934, %v1909, 0.0
        %1928 = vadd.xlane.f32.xlu0 %v1927
        %v1929 = vpop.xlane.xlu0 %1928
        %v1930 = vsel %vm934, %v1910, 0.0
        %1931 = vadd.xlane.f32.xlu0 %v1930
        %v1932 = vpop.xlane.xlu0 %1931
        %v1933 = vsel %vm934, %v1911, 0.0
        %1934 = vadd.xlane.f32.xlu0 %v1933
        %v1935 = vpop.xlane.xlu0 %1934
        %v1936 = vsel %vm934, %v1912, 0.0
        %1937 = vadd.xlane.f32.xlu0 %v1936
        %v1938 = vpop.xlane.xlu0 %1937
        %v1939 = vmul.f32 %v1917, %v1568
        %v1940 = vmul.f32 %v1920, %v1568
        %v1941 = vmul.f32 %v1923, %v1568
        %v1942 = vmul.f32 %v1926, %v1568
        %v1943 = vmul.f32 %v1929, %v1568
        %v1944 = vmul.f32 %v1932, %v1568
        %v1945 = vmul.f32 %v1935, %v1568
        %v1946 = vmul.f32 %v1938, %v1568
        %v1947 = vsub.f32 %v1905, %v1939
        %v1948 = vsub.f32 %v1906, %v1940
        %v1949 = vsub.f32 %v1907, %v1941
        %v1950 = vsub.f32 %v1908, %v1942
        %v1951 = vsub.f32 %v1909, %v1943
        %v1952 = vsub.f32 %v1910, %v1944
        %v1953 = vsub.f32 %v1911, %v1945
        %v1954 = vsub.f32 %v1912, %v1946
        %v1955 = vmul.f32 %v1947, %v1947
        %v1956 = vmul.f32 %v1948, %v1948
        %v1957 = vmul.f32 %v1949, %v1949
        %v1958 = vmul.f32 %v1950, %v1950
        %v1959 = vmul.f32 %v1951, %v1951
        %v1960 = vmul.f32 %v1952, %v1952
        %v1961 = vmul.f32 %v1953, %v1953
        %v1962 = vmul.f32 %v1954, %v1954
        %v1963 = vsel %vm934, %v1955, 0.0
        %1964 = vadd.xlane.f32.xlu0 %v1963
        %v1965 = vpop.xlane.xlu0 %1964
        %v1966 = vsel %vm934, %v1956, 0.0
        %1967 = vadd.xlane.f32.xlu0 %v1966
        %v1968 = vpop.xlane.xlu0 %1967
        %v1969 = vsel %vm934, %v1957, 0.0
        %1970 = vadd.xlane.f32.xlu0 %v1969
        %v1971 = vpop.xlane.xlu0 %1970
        %v1972 = vsel %vm934, %v1958, 0.0
        %1973 = vadd.xlane.f32.xlu0 %v1972
        %v1974 = vpop.xlane.xlu0 %1973
        %v1975 = vsel %vm934, %v1959, 0.0
        %1976 = vadd.xlane.f32.xlu0 %v1975
        %v1977 = vpop.xlane.xlu0 %1976
        %v1978 = vsel %vm934, %v1960, 0.0
        %1979 = vadd.xlane.f32.xlu0 %v1978
        %v1980 = vpop.xlane.xlu0 %1979
        %v1981 = vsel %vm934, %v1961, 0.0
        %1982 = vadd.xlane.f32.xlu0 %v1981
        %v1983 = vpop.xlane.xlu0 %1982
        %v1984 = vsel %vm934, %v1962, 0.0
        %1985 = vadd.xlane.f32.xlu0 %v1984
        %v1986 = vpop.xlane.xlu0 %1985
        %v1987 = vmul.f32 %v1965, %v1568
        %v1988 = vmul.f32 %v1968, %v1568
        %v1989 = vmul.f32 %v1971, %v1568
        %v1990 = vmul.f32 %v1974, %v1568
        %v1991 = vmul.f32 %v1977, %v1568
        %v1992 = vmul.f32 %v1980, %v1568
        %v1993 = vmul.f32 %v1983, %v1568
        %v1994 = vmul.f32 %v1986, %v1568
        %v1995 = vadd.f32 %v1987, 1e-05
        %v1996 = vadd.f32 %v1988, 1e-05
        %v1997 = vadd.f32 %v1989, 1e-05
        %v1998 = vadd.f32 %v1990, 1e-05
        %v1999 = vadd.f32 %v1991, 1e-05
        %v2000 = vadd.f32 %v1992, 1e-05
        %v2001 = vadd.f32 %v1993, 1e-05
        %v2002 = vadd.f32 %v1994, 1e-05
        %v2003 = vrsqrt.pop %v1995
        %v2004 = vmul.f32 %v2003, %v1995
        %v2005 = vmul.f32 %v2004, %v2003
        %v2006 = vmul.f32 0.5, %v2005
        %v2007 = vsub.f32 1.5, %v2006
        %v2008 = vmul.f32 %v2003, %v2007
        %vm2009 = vweird.f32 %v1995
        %vm2010 = vweird.f32 %v2003
        %vm2011 = vmor %vm2009, %vm2010
        %v2012 = vsel %vm2011, %v2003, %v2008
        %v2013 = vrsqrt.pop %v1996
        %v2014 = vmul.f32 %v2013, %v1996
        %v2015 = vmul.f32 %v2014, %v2013
        %v2016 = vmul.f32 0.5, %v2015
        %v2017 = vsub.f32 1.5, %v2016
        %v2018 = vmul.f32 %v2013, %v2017
        %vm2019 = vweird.f32 %v1996
        %vm2020 = vweird.f32 %v2013
        %vm2021 = vmor %vm2019, %vm2020
        %v2022 = vsel %vm2021, %v2013, %v2018
        %v2023 = vrsqrt.pop %v1997
        %v2024 = vmul.f32 %v2023, %v1997
        %v2025 = vmul.f32 %v2024, %v2023
        %v2026 = vmul.f32 0.5, %v2025
        %v2027 = vsub.f32 1.5, %v2026
        %v2028 = vmul.f32 %v2023, %v2027
        %vm2029 = vweird.f32 %v1997
        %vm2030 = vweird.f32 %v2023
        %vm2031 = vmor %vm2029, %vm2030
        %v2032 = vsel %vm2031, %v2023, %v2028
        %v2033 = vrsqrt.pop %v1998
        %v2034 = vmul.f32 %v2033, %v1998
        %v2035 = vmul.f32 %v2034, %v2033
        %v2036 = vmul.f32 0.5, %v2035
        %v2037 = vsub.f32 1.5, %v2036
        %v2038 = vmul.f32 %v2033, %v2037
        %vm2039 = vweird.f32 %v1998
        %vm2040 = vweird.f32 %v2033
        %vm2041 = vmor %vm2039, %vm2040
        %v2042 = vsel %vm2041, %v2033, %v2038
        %v2043 = vrsqrt.pop %v1999
        %v2044 = vmul.f32 %v2043, %v1999
        %v2045 = vmul.f32 %v2044, %v2043
        %v2046 = vmul.f32 0.5, %v2045
        %v2047 = vsub.f32 1.5, %v2046
        %v2048 = vmul.f32 %v2043, %v2047
        %vm2049 = vweird.f32 %v1999
        %vm2050 = vweird.f32 %v2043
        %vm2051 = vmor %vm2049, %vm2050
        %v2052 = vsel %vm2051, %v2043, %v2048
        %v2053 = vrsqrt.pop %v2000
        %v2054 = vmul.f32 %v2053, %v2000
        %v2055 = vmul.f32 %v2054, %v2053
        %v2056 = vmul.f32 0.5, %v2055
        %v2057 = vsub.f32 1.5, %v2056
        %v2058 = vmul.f32 %v2053, %v2057
        %vm2059 = vweird.f32 %v2000
        %vm2060 = vweird.f32 %v2053
        %vm2061 = vmor %vm2059, %vm2060
        %v2062 = vsel %vm2061, %v2053, %v2058
        %v2063 = vrsqrt.pop %v2001
        %v2064 = vmul.f32 %v2063, %v2001
        %v2065 = vmul.f32 %v2064, %v2063
        %v2066 = vmul.f32 0.5, %v2065
        %v2067 = vsub.f32 1.5, %v2066
        %v2068 = vmul.f32 %v2063, %v2067
        %vm2069 = vweird.f32 %v2001
        %vm2070 = vweird.f32 %v2063
        %vm2071 = vmor %vm2069, %vm2070
        %v2072 = vsel %vm2071, %v2063, %v2068
        %v2073 = vrsqrt.pop %v2002
        %v2074 = vmul.f32 %v2073, %v2002
        %v2075 = vmul.f32 %v2074, %v2073
        %v2076 = vmul.f32 0.5, %v2075
        %v2077 = vsub.f32 1.5, %v2076
        %v2078 = vmul.f32 %v2073, %v2077
        %vm2079 = vweird.f32 %v2002
        %vm2080 = vweird.f32 %v2073
        %vm2081 = vmor %vm2079, %vm2080
        %v2082 = vsel %vm2081, %v2073, %v2078
        %v2083 = vmul.f32 %v1947, %v2012
        %v2084 = vmul.f32 %v1948, %v2022
        %v2085 = vmul.f32 %v1949, %v2032
        %v2086 = vmul.f32 %v1950, %v2042
        %v2087 = vmul.f32 %v1951, %v2052
        %v2088 = vmul.f32 %v1952, %v2062
        %v2089 = vmul.f32 %v1953, %v2072
        %v2090 = vmul.f32 %v1954, %v2082
        %v2092 = vperm.slane %v1913, 0
        %v2094 = vmul.f32 %v2083, %v2092
        %v2095 = vmul.f32 %v2084, %v2092
        %v2096 = vmul.f32 %v2085, %v2092
        %v2097 = vmul.f32 %v2086, %v2092
        %v2098 = vmul.f32 %v2087, %v2092
        %v2099 = vmul.f32 %v2088, %v2092
        %v2100 = vmul.f32 %v2089, %v2092
        %v2101 = vmul.f32 %v2090, %v2092
        %v2103 = vperm.slane %v1914, 0
        %v2105 = vadd.f32 %v2094, %v2103
        %v2106 = vadd.f32 %v2095, %v2103
        %v2107 = vadd.f32 %v2096, %v2103
        %v2108 = vadd.f32 %v2097, %v2103
        %v2109 = vadd.f32 %v2098, %v2103
        %v2110 = vadd.f32 %v2099, %v2103
        %v2111 = vadd.f32 %v2100, %v2103
        %v2112 = vadd.f32 %v2101, %v2103
        %v2113 = vld [vmem:[%s17] sm:$0x1]
        %v2114 = vld [vmem:[%s18] sm:$0x1]
        %v2123 = vrot.slane %v2106, 7
        %vm2124 = vcmask 1045509
        %v2125 = vsel %vm2124, %v2123, %v2105
        %v2126 = vrot.slane %v2107, 6
        %vm2127 = vcmask 1046534
        %v2128 = vsel %vm2127, %v2126, %v2125
        %v2129 = vrot.slane %v2108, 5
        %vm2130 = vcmask 1047559
        %v2131 = vsel %vm2130, %v2129, %v2128
        %v2132 = vrot.slane %v2109, 4
        %v2133 = vrot.slane %v2110, 3
        %vm2134 = vcmask 1041409
        %v2135 = vsel %vm2134, %v2133, %v2132
        %v2136 = vrot.slane %v2111, 2
        %vm2137 = vcmask 1042434
        %v2138 = vsel %vm2137, %v2136, %v2135
        %v2139 = vrot.slane %v2112, 1
        %vm2140 = vcmask 1043459
        %v2141 = vsel %vm2140, %v2139, %v2138
        %vm2144 = vcmask 261124
        %v2145 = vsel %vm2144, %v2131, 0.0
        %2146 = vadd.xlane.f32.xlu0 %v2145
        %v2147 = vpop.xlane.xlu0 %2146
        %v2148 = vsel %vm874, %v2141, 0.0
        %2149 = vadd.xlane.f32.xlu0 %v2148
        %v2150 = vpop.xlane.xlu0 %2149
        %v2151 = vmul.f32 %v2147, %v1568
        %v2152 = vmul.f32 %v2150, %v1568
        %v2155 = vrot.slane %v2151, 1
        %v2156 = vrot.slane %v2151, 2
        %v2157 = vrot.slane %v2151, 3
        %v2158 = vrot.slane %v2152, 4
        %v2159 = vrot.slane %v2152, 5
        %v2160 = vrot.slane %v2152, 6
        %v2161 = vrot.slane %v2152, 7
        %v2170 = vsub.f32 %v2105, %v2151
        %v2171 = vsub.f32 %v2106, %v2155
        %v2172 = vsub.f32 %v2107, %v2156
        %v2173 = vsub.f32 %v2108, %v2157
        %v2174 = vsub.f32 %v2109, %v2158
        %v2175 = vsub.f32 %v2110, %v2159
        %v2176 = vsub.f32 %v2111, %v2160
        %v2177 = vsub.f32 %v2112, %v2161
        %v2178 = vmul.f32 %v2170, %v2170
        %v2179 = vmul.f32 %v2171, %v2171
        %v2180 = vmul.f32 %v2172, %v2172
        %v2181 = vmul.f32 %v2173, %v2173
        %v2182 = vmul.f32 %v2174, %v2174
        %v2183 = vmul.f32 %v2175, %v2175
        %v2184 = vmul.f32 %v2176, %v2176
        %v2185 = vmul.f32 %v2177, %v2177
        %v2194 = vrot.slane %v2179, 7
        %v2195 = vsel %vm2124, %v2194, %v2178
        %v2196 = vrot.slane %v2180, 6
        %v2197 = vsel %vm2127, %v2196, %v2195
        %v2198 = vrot.slane %v2181, 5
        %v2199 = vsel %vm2130, %v2198, %v2197
        %v2200 = vrot.slane %v2182, 4
        %v2201 = vrot.slane %v2183, 3
        %v2202 = vsel %vm2134, %v2201, %v2200
        %v2203 = vrot.slane %v2184, 2
        %v2204 = vsel %vm2137, %v2203, %v2202
        %v2205 = vrot.slane %v2185, 1
        %v2206 = vsel %vm2140, %v2205, %v2204
        %v2209 = vsel %vm2144, %v2199, 0.0
        %2210 = vadd.xlane.f32.xlu0 %v2209
        %v2211 = vpop.xlane.xlu0 %2210
        %v2212 = vsel %vm874, %v2206, 0.0
        %2213 = vadd.xlane.f32.xlu0 %v2212
        %v2214 = vpop.xlane.xlu0 %2213
        %v2215 = vmul.f32 %v2211, %v1568
        %v2216 = vmul.f32 %v2214, %v1568
        %v2217 = vadd.f32 %v2215, 1e-05
        %v2218 = vadd.f32 %v2216, 1e-05
        %v2219 = vrsqrt.pop %v2217
        %v2220 = vmul.f32 %v2219, %v2217
        %v2221 = vmul.f32 %v2220, %v2219
        %v2222 = vmul.f32 0.5, %v2221
        %v2223 = vsub.f32 1.5, %v2222
        %v2224 = vmul.f32 %v2219, %v2223
        %vm2225 = vweird.f32 %v2217
        %vm2226 = vweird.f32 %v2219
        %vm2227 = vmor %vm2225, %vm2226
        %v2228 = vsel %vm2227, %v2219, %v2224
        %v2229 = vrsqrt.pop %v2218
        %v2230 = vmul.f32 %v2229, %v2218
        %v2231 = vmul.f32 %v2230, %v2229
        %v2232 = vmul.f32 0.5, %v2231
        %v2233 = vsub.f32 1.5, %v2232
        %v2234 = vmul.f32 %v2229, %v2233
        %vm2235 = vweird.f32 %v2218
        %vm2236 = vweird.f32 %v2229
        %vm2237 = vmor %vm2235, %vm2236
        %v2238 = vsel %vm2237, %v2229, %v2234
        %v2241 = vrot.slane %v2228, 1
        %v2242 = vrot.slane %v2228, 2
        %v2243 = vrot.slane %v2228, 3
        %v2244 = vrot.slane %v2238, 4
        %v2245 = vrot.slane %v2238, 5
        %v2246 = vrot.slane %v2238, 6
        %v2247 = vrot.slane %v2238, 7
        %v2256 = vmul.f32 %v2170, %v2228
        %v2257 = vmul.f32 %v2171, %v2241
        %v2258 = vmul.f32 %v2172, %v2242
        %v2259 = vmul.f32 %v2173, %v2243
        %v2260 = vmul.f32 %v2174, %v2244
        %v2261 = vmul.f32 %v2175, %v2245
        %v2262 = vmul.f32 %v2176, %v2246
        %v2263 = vmul.f32 %v2177, %v2247
        %v2265 = vperm.slane %v2113, 0
        %v2267 = vmul.f32 %v2256, %v2265
        %v2268 = vmul.f32 %v2257, %v2265
        %v2269 = vmul.f32 %v2258, %v2265
        %v2270 = vmul.f32 %v2259, %v2265
        %v2271 = vmul.f32 %v2260, %v2265
        %v2272 = vmul.f32 %v2261, %v2265
        %v2273 = vmul.f32 %v2262, %v2265
        %v2274 = vmul.f32 %v2263, %v2265
        %v2276 = vperm.slane %v2114, 0
        %v2278 = vadd.f32 %v2267, %v2276
        %v2279 = vadd.f32 %v2268, %v2276
        %v2280 = vadd.f32 %v2269, %v2276
        %v2281 = vadd.f32 %v2270, %v2276
        %v2282 = vadd.f32 %v2271, %v2276
        %v2283 = vadd.f32 %v2272, %v2276
        %v2284 = vadd.f32 %v2273, %v2276
        %v2285 = vadd.f32 %v2274, %v2276
        %v2286 = vld [vmem:[%s19] sm:$0xf]
        %v2287 = vld [vmem:[%s19 + $0x4] sm:$0xf]
        %v2288 = vld [vmem:[%s19 + $0x8] sm:$0xf]
        %v2289 = vld [vmem:[%s19 + $0xc] sm:$0xf]
        %v2290 = vpack.c.bf16 %v2278, %v2278
        %v2291 = vpack.c.bf16 %v2279, %v2279
        %v2292 = vpack.c.bf16 %v2280, %v2280
        %v2293 = vpack.c.bf16 %v2281, %v2281
        %v2294 = vpack.c.bf16 %v2282, %v2282
        %v2295 = vpack.c.bf16 %v2283, %v2283
        %v2296 = vpack.c.bf16 %v2284, %v2284
        %v2297 = vpack.c.bf16 %v2285, %v2285
        %v2298 = vld [vmem:[%s20] sm:$0x1]
        %v2300 = vperm.slane %v2298, 0
        %v2310 = vunpack.c.l.b16 %v2290
        %v2311 = vunpack.c.l.b16 %v2291
        %v2312 = vunpack.c.l.b16 %v2292
        %v2313 = vunpack.c.l.b16 %v2293
        %v2314 = vunpack.c.l.b16 %v2294
        %v2315 = vunpack.c.l.b16 %v2295
        %v2316 = vunpack.c.l.b16 %v2296
        %v2317 = vunpack.c.l.b16 %v2297
        %v2318 = vrot.slane %v2310, 4
        %v2319 = vrot.slane %v2311, 3
        %v2320 = vsel %vm2134, %v2319, %v2318
        %v2321 = vrot.slane %v2312, 2
        %v2322 = vsel %vm2137, %v2321, %v2320
        %v2323 = vrot.slane %v2313, 1
        %v2324 = vsel %vm2140, %v2323, %v2322
        %vm2325 = vcmask 1044484
        %v2326 = vsel %vm2325, %v2314, %v2324
        %v2327 = vrot.slane %v2315, 7
        %v2328 = vsel %vm2124, %v2327, %v2326
        %v2329 = vrot.slane %v2316, 6
        %v2330 = vsel %vm2127, %v2329, %v2328
        %v2331 = vrot.slane %v2317, 5
        %v2332 = vsel %vm2130, %v2331, %v2330
        %v2333 = vpack.c.b16 %v2332, %v2332
        %v2338 = vunpack.c.l.b16 %v2286
        %v2339 = vunpack.c.l.b16 %v2287
        %v2340 = vunpack.c.l.b16 %v2288
        %v2341 = vunpack.c.l.b16 %v2289
        %v2342 = vpack.c.b16 %v2339, %v2338
        %v2343 = vpack.c.b16 %v2341, %v2340
        %v2347 = vsel %vm934, %v2333, 0
        %2349 = vmatpush.bf16.msra.mxu0 0
        %2350 = vmatpush.bf16.msra.mxu0 0
        %2351 = vmatpush.bf16.msra.mxu0 0
        %2352 = vmatpush.bf16.msra.mxu0 0
        %2353 = vmatpush.bf16.msra.mxu0 0
        %2354 = vmatpush.bf16.msra.mxu0 0
        %2355 = vmatpush.bf16.msra.mxu0 %v2343
        %2356 = vmatpush.bf16.msra.mxu0 %v2342
        %2357 = vmatmul.bf16.gmra.mxu0 %v2347
        %v2358 = vpop.f32.mrf.mxu0
        %v2359 = vadd.f32 %v2300, %v2358
        %v2360 = vpop.f32.mrf.mxu0
        %2361 = vdwg.mxu0
        %2362 = vst [vmem:[%s668] sm:$0xff] %v2359
        %s2363 = sand.u32 %s494, 1
        %s2364 = scalar_lea.sflag [#allocation4], %s2363
        %s2365 = sand.u32 %s494, 1
        %s2366 = smul.addr %s2365, 8
        %s2367 = scalar_lea.vmem [#allocation3], %s2366
        // Predicated region
        $region105: #{tpu_custom_call.1} parent=103 // pred_check
          %p2368 = pneg %p504
        $region106: #{tpu_custom_call.1} parent=103 // pred_check_branch
          %2370 = sbr.rel (%p2368) target = $region108
        $region107: #{tpu_custom_call.1} parent=103 // pred_region
          %2372 = vsyncadd %s2364, 0
          %s2373 = smul.addr %s35, 8
          %s2374 = scalar_lea.hbm %s21, %s2373
          %s2376 = sshll.u32 %s2367, 4
          %s2377 = int_to_ptr.vmem [resolvable:$true] %s2376
          %s2378 = sshll.u32 %s2374, 4
          %s2379 = int_to_ptr.hbm [resolvable:$true] %s2378
          %2381 = dma.vmem_to_hbm [thread:$0]  %s2377, 128, %s2379, %s2364
        $region108: #{tpu_custom_call.1} parent=103 // pred_fallthru
          _
      $region104: #{tpu_custom_call.1} parent=5 // pred_fallthru
        _
      %p2382 = scmp.le.s32.totalorder 2, %s30
      // Predicated region
      $region109: #{tpu_custom_call.1} parent=5 // pred_check
        %p2383 = pneg %p2382
      $region110: #{tpu_custom_call.1} parent=5 // pred_check_branch
        %2385 = sbr.rel (%p2383) target = $region112
      $region111: #{tpu_custom_call.1} parent=5 // pred_region
        %s2386 = ssub.s32 %s30, 2
        // Predicated region
        $region113: #{tpu_custom_call.1} parent=111 // pred_check
          %p2387 = pneg %p510
        $region114: #{tpu_custom_call.1} parent=111 // pred_check_branch
          %2389 = sbr.rel (%p2387) target = $region116
        $region115: #{tpu_custom_call.1} parent=111 // pred_region
          %s2390 = sand.u32 %s495, 1
          %s2391 = scalar_lea.sflag [#allocation4], %s2390
          %s2392 = sand.u32 %s495, 1
          %s2393 = smul.addr %s2392, 8
          %s2394 = scalar_lea.vmem [#allocation3], %s2393
          %2396 = dma.done %s2391, 128
        $region116: #{tpu_custom_call.1} parent=111 // pred_fallthru
          _
      $region112: #{tpu_custom_call.1} parent=5 // pred_fallthru
        _
    $region6: #{tpu_custom_call.1} parent=1 // loop_footer
      %s34 = sadd.s32 1, %s30
    $region7: #{tpu_custom_call.1} parent=1 // loop_footer_branch
      %29 = sbr.rel target = $region3
    $region8: #{tpu_custom_call.1} parent=1 // loop_exit
      _
    %2397 = vsyncpa [#allocation4], 1
    %s2398 = scalar_lea.sflag [#allocation4], 1
    %2399 = vsyncpa %s2398, 1

</llo_original>
